<compile_context>
chip_gen: v7x
topology: tpu7x:2x2x1
jax: 0.10.0
libtpu: 0.0.40
codegen_flags: <defaults>
</compile_context>

<pallas_src>
import functools

import jax
import jax.numpy as jnp
from jax.experimental import pallas as pl
from jax.experimental.pallas import tpu as pltpu


def _rup(x, m=8):
    return (x + m - 1) // m * m


# --------------------------------------------------------------------------
# Fused kernel: LSTM + role prediction + softmax + role embedding + TPR bind
# --------------------------------------------------------------------------
def _fused_kernel(acts_ref, params_ref, out_ref, *,
                  T, B, F, H, NR, R,
                  off_wih, off_whh, off_bl, off_wr, off_br, off_re,
                  off_x, off_xb,
                  col_lstm, col_pred, col_bound, row_c,
                  softmax_roles):
    TB, BF, G = T * B, B * F, 4 * H

    # Deterministic output slab (unused lanes/rows are zero).
    out_ref[...] = jnp.zeros(out_ref.shape, jnp.float32)

    # ---- parameter / activation views (all 2-D static slices, no reshapes) ----
    w_ih = params_ref[off_wih:off_wih + F, 0:G]          # (F, 4H)
    w_hh = params_ref[off_whh:off_whh + H, 0:G]          # (H, 4H)
    b_l = params_ref[off_bl:off_bl + 1, 0:G]             # (1, 4H)
    x2d = acts_ref[off_x:off_x + TB, 0:F]                # (T*B, F) time-major

    # ---- LSTM input projection hoisted out of the recurrence (one MXU matmul) ----
    gates_in = jnp.dot(x2d, w_ih, preferred_element_type=jnp.float32) + b_l   # (TB, 4H)

    # ---- Time recurrence, fully unrolled (T small & static) ----
    h = jnp.zeros((B, H), jnp.float32)
    c = jnp.zeros((B, H), jnp.float32)
    for t in range(T):
        g = gates_in[t * B:(t + 1) * B, :] + jnp.dot(
            h, w_hh, preferred_element_type=jnp.float32)                      # (B, 4H)
        sg = jax.nn.sigmoid(g)               # one EUP pass over the full gates vreg
        i_g = sg[:, 0 * H:1 * H]
        f_g = sg[:, 1 * H:2 * H]
        o_g = sg[:, 3 * H:4 * H]
        g_g = jnp.tanh(g[:, 2 * H:3 * H])
        c = f_g * c + i_g * g_g
        h = o_g * jnp.tanh(c)
        # direct row-slice store into the packed output slab (time-major rows)
        out_ref[t * B:(t + 1) * B, col_lstm:col_lstm + H] = h

    out_ref[row_c:row_c + B, 0:H] = c                     # final cell state c_n

    # ---- Role path batched over all timesteps (2 small matmuls, no recurrence) ----
    lstm_flat = out_ref[0:TB, col_lstm:col_lstm + H]      # (TB, H), read back from VMEM
    w_role = params_ref[off_wr:off_wr + H, 0:NR]          # (H, NR)
    b_role = params_ref[off_br:off_br + 1, 0:NR]          # (1, NR)
    logits = jnp.dot(lstm_flat, w_role,
                     preferred_element_type=jnp.float32) + b_role             # (TB, NR)
    if softmax_roles:
        m = jnp.max(logits, axis=-1, keepdims=True)
        e = jnp.exp(logits - m)
        preds = e / jnp.sum(e, axis=-1, keepdims=True)
    else:
        preds = logits
    out_ref[0:TB, col_pred:col_pred + NR] = preds

    # ---- TPR binding: single MXU-native contraction with the pre-transposed
    #      block-diagonal filler matrix (no per-batch loop / transposes) ----
    remb = params_ref[off_re:off_re + NR, 0:R]            # (NR, R)
    roles = jnp.dot(preds, remb, preferred_element_type=jnp.float32)          # (TB, R)
    xblk_t = acts_ref[off_xb:off_xb + BF, 0:TB]           # (B*F, T*B)
    bound = jnp.dot(xblk_t, roles, preferred_element_type=jnp.float32)        # (B*F, R)
    out_ref[0:BF, col_bound:col_bound + R] = bound


# --------------------------------------------------------------------------
# Wrapper: pack inputs lane-dense, call the kernel once, unpack outputs
# --------------------------------------------------------------------------
def fused_forward(x_tbf, w_ih, w_hh, b_lstm, w_role, b_role, role_emb,
                  *, softmax_roles):
    T, B, F = x_tbf.shape
    H = w_hh.shape[0]
    NR, R = role_emb.shape
    TB, BF, G = T * B, B * F, 4 * H
    LANES = max(128, G)

    # ---- pack all parameters into ONE lane-dense slab (one input DMA) ----
    off_wih = 0
    off_whh = _rup(off_wih + F)
    off_bl = _rup(off_whh + H)
    off_wr = _rup(off_bl + 1)
    off_br = _rup(off_wr + H)
    off_re = _rup(off_br + 1)
    p_rows = _rup(off_re + NR)
    params = jnp.zeros((p_rows, LANES), jnp.float32)
    params = params.at[off_wih:off_wih + F, 0:G].set(w_ih)
    params = params.at[off_whh:off_whh + H, 0:G].set(w_hh)
    params = params.at[off_bl:off_bl + 1, 0:G].set(b_lstm)
    params = params.at[off_wr:off_wr + H, 0:NR].set(w_role)
    params = params.at[off_br:off_br + 1, 0:NR].set(b_role)
    params = params.at[off_re:off_re + NR, 0:R].set(role_emb)

    # ---- pack activations: time-major 2-D fillers + block-diag bind matrix ----
    x2d = x_tbf.reshape(TB, F)                                     # rows = t*B + b
    # Xblk_T[b*F+f, t*B+b'] = x[t,b,f] * (b == b')  -> bind becomes one plain matmul
    xblk_t = jnp.einsum('tbf,bc->bftc', x_tbf,
                        jnp.eye(B, dtype=x_tbf.dtype)).reshape(BF, TB)
    off_x = 0
    off_xb = _rup(off_x + TB)
    a_rows = _rup(off_xb + BF)
    acts = jnp.zeros((a_rows, LANES), jnp.float32)
    acts = acts.at[off_x:off_x + TB, 0:F].set(x2d)
    acts = acts.at[off_xb:off_xb + BF, 0:TB].set(xblk_t)

    # ---- output slab layout (one lane-dense writeback) ----
    col_lstm = 0
    col_pred = H
    col_bound = H + _rup(NR)
    row_c = _rup(TB)
    o_rows = _rup(row_c + B)
    assert col_bound + R <= LANES and max(F, TB) <= LANES

    kernel = functools.partial(
        _fused_kernel,
        T=T, B=B, F=F, H=H, NR=NR, R=R,
        off_wih=off_wih, off_whh=off_whh, off_bl=off_bl, off_wr=off_wr,
        off_br=off_br, off_re=off_re, off_x=off_x, off_xb=off_xb,
        col_lstm=col_lstm, col_pred=col_pred, col_bound=col_bound, row_c=row_c,
        softmax_roles=softmax_roles)

    slab = pl.pallas_call(
        kernel,
        out_shape=jax.ShapeDtypeStruct((o_rows, LANES), jnp.float32),
        in_specs=[pl.BlockSpec(memory_space=pltpu.MemorySpace.VMEM)] * 2,
        out_specs=pl.BlockSpec(memory_space=pltpu.MemorySpace.VMEM),
    )(acts, params)

    # ---- unpack (pure layout plumbing, done in XLA) ----
    lstm_out = slab[0:TB, col_lstm:col_lstm + H].reshape(T, B, H)
    role_predictions = slab[0:TB, col_pred:col_pred + NR].reshape(T, B, NR)
    output = slab[0:BF, col_bound:col_bound + R].reshape(B, F * R)
    c_n = slab[row_c:row_c + B, 0:H]
    return output, role_predictions, lstm_out, c_n


# --------------------------------------------------------------------------
# Full forward (glue in plain JAX: embedding gather, transposes)
# --------------------------------------------------------------------------
def role_learning_tpr_encoder_forward(params, filler_list, *, softmax_roles=True):
    fillers_embedded_btf = jnp.take(params["filler_embedding"], filler_list, axis=0)  # (B,T,F)
    x_tbf = jnp.transpose(fillers_embedded_btf, (1, 0, 2))                             # (T,B,F)

    output, role_predictions, lstm_out, c_n = fused_forward(
        x_tbf, params["w_ih"], params["w_hh"], params["b_lstm"],
        params["w_role"], params["b_role"], params["role_embedding"],
        softmax_roles=softmax_roles)

    h_n = lstm_out[-1]                                    # h_n == last LSTM output
    hidden = (h_n[None, :, :], c_n[None, :, :])           # (1,B,H) each
    # has_last = 0 (final_layer_width is None) -> no final linear
    return output, role_predictions, lstm_out, hidden


# --------------------------------------------------------------------------
# Pure-JAX reference (for correctness check only)
# --------------------------------------------------------------------------
def reference_forward(params, filler_list, *, softmax_roles=True):
    emb = jnp.take(params["filler_embedding"], filler_list, axis=0)    # (B,T,F)
    x = jnp.transpose(emb, (1, 0, 2))                                  # (T,B,F)
    H = params["w_hh"].shape[0]
    B = x.shape[1]

    def step(carry, xt):
        h, c = carry
        gates = xt @ params["w_ih"] + h @ params["w_hh"] + params["b_lstm"][0]
        i = jax.nn.sigmoid(gates[:, 0 * H:1 * H])
        f = jax.nn.sigmoid(gates[:, 1 * H:2 * H])
        g = jnp.tanh(gates[:, 2 * H:3 * H])
        o = jax.nn.sigmoid(gates[:, 3 * H:4 * H])
        c = f * c + i * g
        h = o * jnp.tanh(c)
        return (h, c), h

    (h_n, c_n), lstm_out = jax.lax.scan(
        step, (jnp.zeros((B, H), jnp.float32), jnp.zeros((B, H), jnp.float32)), x)

    logits = lstm_out @ params["w_role"] + params["b_role"][0]          # (T,B,NR)
    preds = jax.nn.softmax(logits, axis=-1) if softmax_roles else logits
    roles = preds @ params["role_embedding"]                            # (T,B,R)
    roles_bt = jnp.transpose(roles, (1, 0, 2))                          # (B,T,R)
    bound = jnp.einsum("btf,btr->bfr", emb, roles_bt)
    out = bound.reshape(bound.shape[0], -1)
    return out, preds, lstm_out, (h_n[None], c_n[None])


# --------------------------------------------------------------------------
if __name__ == "__main__":
    B, T = 2, 8
    N_FILLERS, F = 16, 8
    N_ROLES, R = 4, 8
    H = 32

    key = jax.random.PRNGKey(0)
    ks = jax.random.split(key, 8)
    params = {
        "filler_embedding": 0.1 * jax.random.normal(ks[0], (N_FILLERS, F), jnp.float32),
        "w_ih": 0.1 * jax.random.normal(ks[1], (F, 4 * H), jnp.float32),
        "w_hh": 0.1 * jax.random.normal(ks[2], (H, 4 * H), jnp.float32),
        "b_lstm": 0.1 * jax.random.normal(ks[3], (1, 4 * H), jnp.float32),  # b_ih + b_hh combined
        "w_role": 0.1 * jax.random.normal(ks[4], (H, N_ROLES), jnp.float32),
        "b_role": 0.1 * jax.random.normal(ks[5], (1, N_ROLES), jnp.float32),
        "role_embedding": 0.1 * jax.random.normal(ks[6], (N_ROLES, R), jnp.float32),
    }
    filler_list = jax.random.randint(ks[7], (B, T), 0, N_FILLERS, dtype=jnp.int32)

    out, role_preds, lstm_out, (h_n, c_n) = role_learning_tpr_encoder_forward(
        params, filler_list, softmax_roles=True)
    jax.block_until_ready((out, role_preds, lstm_out, h_n, c_n))

    # correctness check vs. pure-JAX reference
    r_out, r_preds, r_lstm, (r_h, r_c) = reference_forward(
        params, filler_list, softmax_roles=True)
    assert out.shape == (B, F * R)
    assert role_preds.shape == (T, B, N_ROLES)
    assert lstm_out.shape == (T, B, H)
    assert h_n.shape == (1, B, H) and c_n.shape == (1, B, H)
    for a, b in ((out, r_out), (role_preds, r_preds), (lstm_out, r_lstm),
                 (h_n, r_h), (c_n, r_c)):
        assert jnp.allclose(a, b, rtol=1e-4, atol=1e-4), "mismatch vs reference"

    print("KERNEL_OK")
</pallas_src>

<mosaic_0001>
module attributes {stable_mosaic.version = 11 : i64} {
  func.func @_fused_kernel(%arg0: memref<32x128xf32, #tpu.memory_space<vmem>>, %arg1: memref<96x128xf32, #tpu.memory_space<vmem>>, %arg2: memref<24x128xf32, #tpu.memory_space<vmem>>) attributes {dimension_semantics = [], scalar_prefetch = 0 : i64, scratch_operands = 0 : i64, tpu.core_type = #tpu.core_type<tc>} {
    %cst = arith.constant 0.000000e+00 : f32
    %0 = vector.broadcast %cst : f32 to vector<24x128xf32>
    %c0 = arith.constant 0 : index
    %c0_0 = arith.constant 0 : index
    %1 = vector.load %arg2[%c0, %c0_0] : memref<24x128xf32, #tpu.memory_space<vmem>>, vector<24x128xf32>
    tpu.vector_store %arg2[%c0, %c0_0], %0 {strides = array<i32>} : memref<24x128xf32, #tpu.memory_space<vmem>>, vector<24x128xf32>,
    %c0_1 = arith.constant 0 : index
    %c0_2 = arith.constant 0 : index
    %2 = vector.load %arg1[%c0_1, %c0_2] : memref<96x128xf32, #tpu.memory_space<vmem>>, vector<8x128xf32>
    %c8 = arith.constant 8 : index
    %c0_3 = arith.constant 0 : index
    %3 = vector.load %arg1[%c8, %c0_3] : memref<96x128xf32, #tpu.memory_space<vmem>>, vector<32x128xf32>
    %c40 = arith.constant 40 : index
    %c0_4 = arith.constant 0 : index
    %4 = vector.load %arg1[%c40, %c0_4] : memref<96x128xf32, #tpu.memory_space<vmem>>, vector<1x128xf32>
    %c0_5 = arith.constant 0 : index
    %c0_6 = arith.constant 0 : index
    %5 = vector.load %arg0[%c0_5, %c0_6] : memref<32x128xf32, #tpu.memory_space<vmem>>, vector<16x8xf32>
    %cst_7 = arith.constant dense<0.000000e+00> : vector<16x128xf32>
    %6 = tpu.matmul %5, %2, %cst_7 {dimension_numbers = #tpu.dot_dimension_numbers<[1], [0], [0], [1], [0, 0, 1, 1], [], []>} : vector<16x8xf32>, vector<8x128xf32>, vector<16x128xf32> -> vector<16x128xf32>
    %7 = vector.broadcast %4 : vector<1x128xf32> to vector<16x128xf32>
    %8 = arith.addf %6, %7 : vector<16x128xf32>
    %cst_8 = arith.constant 0.000000e+00 : f32
    %9 = vector.broadcast %cst_8 : f32 to vector<2x32xf32>
    %cst_9 = arith.constant 0.000000e+00 : f32
    %10 = vector.broadcast %cst_9 : f32 to vector<2x32xf32>
    %11 = vector.extract_strided_slice %8 {offsets = [0, 0], sizes = [2, 128], strides = [1, 1]} : vector<16x128xf32> to vector<2x128xf32>
    %cst_10 = arith.constant dense<0.000000e+00> : vector<2x128xf32>
    %12 = tpu.matmul %9, %3, %cst_10 {dimension_numbers = #tpu.dot_dimension_numbers<[1], [0], [0], [1], [0, 0, 1, 1], [], []>} : vector<2x32xf32>, vector<32x128xf32>, vector<2x128xf32> -> vector<2x128xf32>
    %13 = arith.addf %11, %12 : vector<2x128xf32>
    %14 = arith.negf %13 : vector<2x128xf32>
    %15 = math.exp %14 : vector<2x128xf32>
    %cst_11 = arith.constant 1.000000e+00 : f32
    %16 = vector.broadcast %cst_11 : f32 to vector<2x128xf32>
    %17 = arith.addf %16, %15 : vector<2x128xf32>
    %18 = arith.divf %16, %17 : vector<2x128xf32>
    %19 = vector.extract_strided_slice %18 {offsets = [0, 0], sizes = [2, 32], strides = [1, 1]} : vector<2x128xf32> to vector<2x32xf32>
    %20 = vector.extract_strided_slice %18 {offsets = [0, 32], sizes = [2, 32], strides = [1, 1]} : vector<2x128xf32> to vector<2x32xf32>
    %21 = vector.extract_strided_slice %18 {offsets = [0, 96], sizes = [2, 32], strides = [1, 1]} : vector<2x128xf32> to vector<2x32xf32>
    %22 = vector.extract_strided_slice %13 {offsets = [0, 64], sizes = [2, 32], strides = [1, 1]} : vector<2x128xf32> to vector<2x32xf32>
    %23 = math.tanh %22 : vector<2x32xf32>
    %24 = arith.mulf %20, %10 : vector<2x32xf32>
    %25 = arith.mulf %19, %23 : vector<2x32xf32>
    %26 = arith.addf %24, %25 : vector<2x32xf32>
    %27 = math.tanh %26 : vector<2x32xf32>
    %28 = arith.mulf %21, %27 : vector<2x32xf32>
    %c0_12 = arith.constant 0 : index
    %c0_13 = arith.constant 0 : index
    %29 = vector.load %arg2[%c0_12, %c0_13] : memref<24x128xf32, #tpu.memory_space<vmem>>, vector<2x32xf32>
    tpu.vector_store %arg2[%c0_12, %c0_13], %28 {strides = array<i32>} : memref<24x128xf32, #tpu.memory_space<vmem>>, vector<2x32xf32>,
    %30 = vector.extract_strided_slice %8 {offsets = [2, 0], sizes = [2, 128], strides = [1, 1]} : vector<16x128xf32> to vector<2x128xf32>
    %cst_14 = arith.constant dense<0.000000e+00> : vector<2x128xf32>
    %31 = tpu.matmul %28, %3, %cst_14 {dimension_numbers = #tpu.dot_dimension_numbers<[1], [0], [0], [1], [0, 0, 1, 1], [], []>} : vector<2x32xf32>, vector<32x128xf32>, vector<2x128xf32> -> vector<2x128xf32>
    %32 = arith.addf %30, %31 : vector<2x128xf32>
    %33 = arith.negf %32 : vector<2x128xf32>
    %34 = math.exp %33 : vector<2x128xf32>
    %cst_15 = arith.constant 1.000000e+00 : f32
    %35 = vector.broadcast %cst_15 : f32 to vector<2x128xf32>
    %36 = arith.addf %35, %34 : vector<2x128xf32>
    %37 = arith.divf %35, %36 : vector<2x128xf32>
    %38 = vector.extract_strided_slice %37 {offsets = [0, 0], sizes = [2, 32], strides = [1, 1]} : vector<2x128xf32> to vector<2x32xf32>
    %39 = vector.extract_strided_slice %37 {offsets = [0, 32], sizes = [2, 32], strides = [1, 1]} : vector<2x128xf32> to vector<2x32xf32>
    %40 = vector.extract_strided_slice %37 {offsets = [0, 96], sizes = [2, 32], strides = [1, 1]} : vector<2x128xf32> to vector<2x32xf32>
    %41 = vector.extract_strided_slice %32 {offsets = [0, 64], sizes = [2, 32], strides = [1, 1]} : vector<2x128xf32> to vector<2x32xf32>
    %42 = math.tanh %41 : vector<2x32xf32>
    %43 = arith.mulf %39, %26 : vector<2x32xf32>
    %44 = arith.mulf %38, %42 : vector<2x32xf32>
    %45 = arith.addf %43, %44 : vector<2x32xf32>
    %46 = math.tanh %45 : vector<2x32xf32>
    %47 = arith.mulf %40, %46 : vector<2x32xf32>
    %c2 = arith.constant 2 : index
    %c0_16 = arith.constant 0 : index
    %48 = vector.load %arg2[%c2, %c0_16] : memref<24x128xf32, #tpu.memory_space<vmem>>, vector<2x32xf32>
    tpu.vector_store %arg2[%c2, %c0_16], %47 {strides = array<i32>} : memref<24x128xf32, #tpu.memory_space<vmem>>, vector<2x32xf32>,
    %49 = vector.extract_strided_slice %8 {offsets = [4, 0], sizes = [2, 128], strides = [1, 1]} : vector<16x128xf32> to vector<2x128xf32>
    %cst_17 = arith.constant dense<0.000000e+00> : vector<2x128xf32>
    %50 = tpu.matmul %47, %3, %cst_17 {dimension_numbers = #tpu.dot_dimension_numbers<[1], [0], [0], [1], [0, 0, 1, 1], [], []>} : vector<2x32xf32>, vector<32x128xf32>, vector<2x128xf32> -> vector<2x128xf32>
    %51 = arith.addf %49, %50 : vector<2x128xf32>
    %52 = arith.negf %51 : vector<2x128xf32>
    %53 = math.exp %52 : vector<2x128xf32>
    %cst_18 = arith.constant 1.000000e+00 : f32
    %54 = vector.broadcast %cst_18 : f32 to vector<2x128xf32>
    %55 = arith.addf %54, %53 : vector<2x128xf32>
    %56 = arith.divf %54, %55 : vector<2x128xf32>
    %57 = vector.extract_strided_slice %56 {offsets = [0, 0], sizes = [2, 32], strides = [1, 1]} : vector<2x128xf32> to vector<2x32xf32>
    %58 = vector.extract_strided_slice %56 {offsets = [0, 32], sizes = [2, 32], strides = [1, 1]} : vector<2x128xf32> to vector<2x32xf32>
    %59 = vector.extract_strided_slice %56 {offsets = [0, 96], sizes = [2, 32], strides = [1, 1]} : vector<2x128xf32> to vector<2x32xf32>
    %60 = vector.extract_strided_slice %51 {offsets = [0, 64], sizes = [2, 32], strides = [1, 1]} : vector<2x128xf32> to vector<2x32xf32>
    %61 = math.tanh %60 : vector<2x32xf32>
    %62 = arith.mulf %58, %45 : vector<2x32xf32>
    %63 = arith.mulf %57, %61 : vector<2x32xf32>
    %64 = arith.addf %62, %63 : vector<2x32xf32>
    %65 = math.tanh %64 : vector<2x32xf32>
    %66 = arith.mulf %59, %65 : vector<2x32xf32>
    %c4 = arith.constant 4 : index
    %c0_19 = arith.constant 0 : index
    %67 = vector.load %arg2[%c4, %c0_19] : memref<24x128xf32, #tpu.memory_space<vmem>>, vector<2x32xf32>
    tpu.vector_store %arg2[%c4, %c0_19], %66 {strides = array<i32>} : memref<24x128xf32, #tpu.memory_space<vmem>>, vector<2x32xf32>,
    %68 = vector.extract_strided_slice %8 {offsets = [6, 0], sizes = [2, 128], strides = [1, 1]} : vector<16x128xf32> to vector<2x128xf32>
    %cst_20 = arith.constant dense<0.000000e+00> : vector<2x128xf32>
    %69 = tpu.matmul %66, %3, %cst_20 {dimension_numbers = #tpu.dot_dimension_numbers<[1], [0], [0], [1], [0, 0, 1, 1], [], []>} : vector<2x32xf32>, vector<32x128xf32>, vector<2x128xf32> -> vector<2x128xf32>
    %70 = arith.addf %68, %69 : vector<2x128xf32>
    %71 = arith.negf %70 : vector<2x128xf32>
    %72 = math.exp %71 : vector<2x128xf32>
    %cst_21 = arith.constant 1.000000e+00 : f32
    %73 = vector.broadcast %cst_21 : f32 to vector<2x128xf32>
    %74 = arith.addf %73, %72 : vector<2x128xf32>
    %75 = arith.divf %73, %74 : vector<2x128xf32>
    %76 = vector.extract_strided_slice %75 {offsets = [0, 0], sizes = [2, 32], strides = [1, 1]} : vector<2x128xf32> to vector<2x32xf32>
    %77 = vector.extract_strided_slice %75 {offsets = [0, 32], sizes = [2, 32], strides = [1, 1]} : vector<2x128xf32> to vector<2x32xf32>
    %78 = vector.extract_strided_slice %75 {offsets = [0, 96], sizes = [2, 32], strides = [1, 1]} : vector<2x128xf32> to vector<2x32xf32>
    %79 = vector.extract_strided_slice %70 {offsets = [0, 64], sizes = [2, 32], strides = [1, 1]} : vector<2x128xf32> to vector<2x32xf32>
    %80 = math.tanh %79 : vector<2x32xf32>
    %81 = arith.mulf %77, %64 : vector<2x32xf32>
    %82 = arith.mulf %76, %80 : vector<2x32xf32>
    %83 = arith.addf %81, %82 : vector<2x32xf32>
    %84 = math.tanh %83 : vector<2x32xf32>
    %85 = arith.mulf %78, %84 : vector<2x32xf32>
    %c6 = arith.constant 6 : index
    %c0_22 = arith.constant 0 : index
    %86 = vector.load %arg2[%c6, %c0_22] : memref<24x128xf32, #tpu.memory_space<vmem>>, vector<2x32xf32>
    tpu.vector_store %arg2[%c6, %c0_22], %85 {strides = array<i32>} : memref<24x128xf32, #tpu.memory_space<vmem>>, vector<2x32xf32>,
    %87 = vector.extract_strided_slice %8 {offsets = [8, 0], sizes = [2, 128], strides = [1, 1]} : vector<16x128xf32> to vector<2x128xf32>
    %cst_23 = arith.constant dense<0.000000e+00> : vector<2x128xf32>
    %88 = tpu.matmul %85, %3, %cst_23 {dimension_numbers = #tpu.dot_dimension_numbers<[1], [0], [0], [1], [0, 0, 1, 1], [], []>} : vector<2x32xf32>, vector<32x128xf32>, vector<2x128xf32> -> vector<2x128xf32>
    %89 = arith.addf %87, %88 : vector<2x128xf32>
    %90 = arith.negf %89 : vector<2x128xf32>
    %91 = math.exp %90 : vector<2x128xf32>
    %cst_24 = arith.constant 1.000000e+00 : f32
    %92 = vector.broadcast %cst_24 : f32 to vector<2x128xf32>
    %93 = arith.addf %92, %91 : vector<2x128xf32>
    %94 = arith.divf %92, %93 : vector<2x128xf32>
    %95 = vector.extract_strided_slice %94 {offsets = [0, 0], sizes = [2, 32], strides = [1, 1]} : vector<2x128xf32> to vector<2x32xf32>
    %96 = vector.extract_strided_slice %94 {offsets = [0, 32], sizes = [2, 32], strides = [1, 1]} : vector<2x128xf32> to vector<2x32xf32>
    %97 = vector.extract_strided_slice %94 {offsets = [0, 96], sizes = [2, 32], strides = [1, 1]} : vector<2x128xf32> to vector<2x32xf32>
    %98 = vector.extract_strided_slice %89 {offsets = [0, 64], sizes = [2, 32], strides = [1, 1]} : vector<2x128xf32> to vector<2x32xf32>
    %99 = math.tanh %98 : vector<2x32xf32>
    %100 = arith.mulf %96, %83 : vector<2x32xf32>
    %101 = arith.mulf %95, %99 : vector<2x32xf32>
    %102 = arith.addf %100, %101 : vector<2x32xf32>
    %103 = math.tanh %102 : vector<2x32xf32>
    %104 = arith.mulf %97, %103 : vector<2x32xf32>
    %c8_25 = arith.constant 8 : index
    %c0_26 = arith.constant 0 : index
    %105 = vector.load %arg2[%c8_25, %c0_26] : memref<24x128xf32, #tpu.memory_space<vmem>>, vector<2x32xf32>
    tpu.vector_store %arg2[%c8_25, %c0_26], %104 {strides = array<i32>} : memref<24x128xf32, #tpu.memory_space<vmem>>, vector<2x32xf32>,
    %106 = vector.extract_strided_slice %8 {offsets = [10, 0], sizes = [2, 128], strides = [1, 1]} : vector<16x128xf32> to vector<2x128xf32>
    %cst_27 = arith.constant dense<0.000000e+00> : vector<2x128xf32>
    %107 = tpu.matmul %104, %3, %cst_27 {dimension_numbers = #tpu.dot_dimension_numbers<[1], [0], [0], [1], [0, 0, 1, 1], [], []>} : vector<2x32xf32>, vector<32x128xf32>, vector<2x128xf32> -> vector<2x128xf32>
    %108 = arith.addf %106, %107 : vector<2x128xf32>
    %109 = arith.negf %108 : vector<2x128xf32>
    %110 = math.exp %109 : vector<2x128xf32>
    %cst_28 = arith.constant 1.000000e+00 : f32
    %111 = vector.broadcast %cst_28 : f32 to vector<2x128xf32>
    %112 = arith.addf %111, %110 : vector<2x128xf32>
    %113 = arith.divf %111, %112 : vector<2x128xf32>
    %114 = vector.extract_strided_slice %113 {offsets = [0, 0], sizes = [2, 32], strides = [1, 1]} : vector<2x128xf32> to vector<2x32xf32>
    %115 = vector.extract_strided_slice %113 {offsets = [0, 32], sizes = [2, 32], strides = [1, 1]} : vector<2x128xf32> to vector<2x32xf32>
    %116 = vector.extract_strided_slice %113 {offsets = [0, 96], sizes = [2, 32], strides = [1, 1]} : vector<2x128xf32> to vector<2x32xf32>
    %117 = vector.extract_strided_slice %108 {offsets = [0, 64], sizes = [2, 32], strides = [1, 1]} : vector<2x128xf32> to vector<2x32xf32>
    %118 = math.tanh %117 : vector<2x32xf32>
    %119 = arith.mulf %115, %102 : vector<2x32xf32>
    %120 = arith.mulf %114, %118 : vector<2x32xf32>
    %121 = arith.addf %119, %120 : vector<2x32xf32>
    %122 = math.tanh %121 : vector<2x32xf32>
    %123 = arith.mulf %116, %122 : vector<2x32xf32>
    %c10 = arith.constant 10 : index
    %c0_29 = arith.constant 0 : index
    %124 = vector.load %arg2[%c10, %c0_29] : memref<24x128xf32, #tpu.memory_space<vmem>>, vector<2x32xf32>
    tpu.vector_store %arg2[%c10, %c0_29], %123 {strides = array<i32>} : memref<24x128xf32, #tpu.memory_space<vmem>>, vector<2x32xf32>,
    %125 = vector.extract_strided_slice %8 {offsets = [12, 0], sizes = [2, 128], strides = [1, 1]} : vector<16x128xf32> to vector<2x128xf32>
    %cst_30 = arith.constant dense<0.000000e+00> : vector<2x128xf32>
    %126 = tpu.matmul %123, %3, %cst_30 {dimension_numbers = #tpu.dot_dimension_numbers<[1], [0], [0], [1], [0, 0, 1, 1], [], []>} : vector<2x32xf32>, vector<32x128xf32>, vector<2x128xf32> -> vector<2x128xf32>
    %127 = arith.addf %125, %126 : vector<2x128xf32>
    %128 = arith.negf %127 : vector<2x128xf32>
    %129 = math.exp %128 : vector<2x128xf32>
    %cst_31 = arith.constant 1.000000e+00 : f32
    %130 = vector.broadcast %cst_31 : f32 to vector<2x128xf32>
    %131 = arith.addf %130, %129 : vector<2x128xf32>
    %132 = arith.divf %130, %131 : vector<2x128xf32>
    %133 = vector.extract_strided_slice %132 {offsets = [0, 0], sizes = [2, 32], strides = [1, 1]} : vector<2x128xf32> to vector<2x32xf32>
    %134 = vector.extract_strided_slice %132 {offsets = [0, 32], sizes = [2, 32], strides = [1, 1]} : vector<2x128xf32> to vector<2x32xf32>
    %135 = vector.extract_strided_slice %132 {offsets = [0, 96], sizes = [2, 32], strides = [1, 1]} : vector<2x128xf32> to vector<2x32xf32>
    %136 = vector.extract_strided_slice %127 {offsets = [0, 64], sizes = [2, 32], strides = [1, 1]} : vector<2x128xf32> to vector<2x32xf32>
    %137 = math.tanh %136 : vector<2x32xf32>
    %138 = arith.mulf %134, %121 : vector<2x32xf32>
    %139 = arith.mulf %133, %137 : vector<2x32xf32>
    %140 = arith.addf %138, %139 : vector<2x32xf32>
    %141 = math.tanh %140 : vector<2x32xf32>
    %142 = arith.mulf %135, %141 : vector<2x32xf32>
    %c12 = arith.constant 12 : index
    %c0_32 = arith.constant 0 : index
    %143 = vector.load %arg2[%c12, %c0_32] : memref<24x128xf32, #tpu.memory_space<vmem>>, vector<2x32xf32>
    tpu.vector_store %arg2[%c12, %c0_32], %142 {strides = array<i32>} : memref<24x128xf32, #tpu.memory_space<vmem>>, vector<2x32xf32>,
    %144 = vector.extract_strided_slice %8 {offsets = [14, 0], sizes = [2, 128], strides = [1, 1]} : vector<16x128xf32> to vector<2x128xf32>
    %cst_33 = arith.constant dense<0.000000e+00> : vector<2x128xf32>
    %145 = tpu.matmul %142, %3, %cst_33 {dimension_numbers = #tpu.dot_dimension_numbers<[1], [0], [0], [1], [0, 0, 1, 1], [], []>} : vector<2x32xf32>, vector<32x128xf32>, vector<2x128xf32> -> vector<2x128xf32>
    %146 = arith.addf %144, %145 : vector<2x128xf32>
    %147 = arith.negf %146 : vector<2x128xf32>
    %148 = math.exp %147 : vector<2x128xf32>
    %cst_34 = arith.constant 1.000000e+00 : f32
    %149 = vector.broadcast %cst_34 : f32 to vector<2x128xf32>
    %150 = arith.addf %149, %148 : vector<2x128xf32>
    %151 = arith.divf %149, %150 : vector<2x128xf32>
    %152 = vector.extract_strided_slice %151 {offsets = [0, 0], sizes = [2, 32], strides = [1, 1]} : vector<2x128xf32> to vector<2x32xf32>
    %153 = vector.extract_strided_slice %151 {offsets = [0, 32], sizes = [2, 32], strides = [1, 1]} : vector<2x128xf32> to vector<2x32xf32>
    %154 = vector.extract_strided_slice %151 {offsets = [0, 96], sizes = [2, 32], strides = [1, 1]} : vector<2x128xf32> to vector<2x32xf32>
    %155 = vector.extract_strided_slice %146 {offsets = [0, 64], sizes = [2, 32], strides = [1, 1]} : vector<2x128xf32> to vector<2x32xf32>
    %156 = math.tanh %155 : vector<2x32xf32>
    %157 = arith.mulf %153, %140 : vector<2x32xf32>
    %158 = arith.mulf %152, %156 : vector<2x32xf32>
    %159 = arith.addf %157, %158 : vector<2x32xf32>
    %160 = math.tanh %159 : vector<2x32xf32>
    %161 = arith.mulf %154, %160 : vector<2x32xf32>
    %c14 = arith.constant 14 : index
    %c0_35 = arith.constant 0 : index
    %162 = vector.load %arg2[%c14, %c0_35] : memref<24x128xf32, #tpu.memory_space<vmem>>, vector<2x32xf32>
    tpu.vector_store %arg2[%c14, %c0_35], %161 {strides = array<i32>} : memref<24x128xf32, #tpu.memory_space<vmem>>, vector<2x32xf32>,
    %c16 = arith.constant 16 : index
    %c0_36 = arith.constant 0 : index
    %163 = vector.load %arg2[%c16, %c0_36] : memref<24x128xf32, #tpu.memory_space<vmem>>, vector<2x32xf32>
    tpu.vector_store %arg2[%c16, %c0_36], %159 {strides = array<i32>} : memref<24x128xf32, #tpu.memory_space<vmem>>, vector<2x32xf32>,
    %c0_37 = arith.constant 0 : index
    %c0_38 = arith.constant 0 : index
    %164 = vector.load %arg2[%c0_37, %c0_38] : memref<24x128xf32, #tpu.memory_space<vmem>>, vector<16x32xf32>
    %c48 = arith.constant 48 : index
    %c0_39 = arith.constant 0 : index
    %165 = vector.load %arg1[%c48, %c0_39] : memref<96x128xf32, #tpu.memory_space<vmem>>, vector<32x4xf32>
    %c80 = arith.constant 80 : index
    %c0_40 = arith.constant 0 : index
    %166 = vector.load %arg1[%c80, %c0_40] : memref<96x128xf32, #tpu.memory_space<vmem>>, vector<1x4xf32>
    %cst_41 = arith.constant dense<0.000000e+00> : vector<16x4xf32>
    %167 = tpu.matmul %164, %165, %cst_41 {dimension_numbers = #tpu.dot_dimension_numbers<[1], [0], [0], [1], [0, 0, 1, 1], [], []>} : vector<16x32xf32>, vector<32x4xf32>, vector<16x4xf32> -> vector<16x4xf32>
    %168 = vector.broadcast %166 : vector<1x4xf32> to vector<16x4xf32>
    %169 = arith.addf %167, %168 : vector<16x4xf32>
    %cst_42 = arith.constant dense<0xFF800000> : vector<16xf32>
    %170 = vector.multi_reduction <maximumf>, %169, %cst_42 [1] : vector<16x4xf32> to vector<16xf32>
    %171 = vector.shape_cast %170 : vector<16xf32> to vector<16x1xf32>
    %172 = vector.broadcast %171 : vector<16x1xf32> to vector<16x4xf32>
    %173 = arith.subf %169, %172 : vector<16x4xf32>
    %174 = math.exp %173 : vector<16x4xf32>
    %cst_43 = arith.constant dense<0.000000e+00> : vector<16xf32>
    %175 = vector.multi_reduction <add>, %174, %cst_43 [1] : vector<16x4xf32> to vector<16xf32>
    %176 = vector.shape_cast %175 : vector<16xf32> to vector<16x1xf32>
    %177 = vector.broadcast %176 : vector<16x1xf32> to vector<16x4xf32>
    %178 = arith.divf %174, %177 : vector<16x4xf32>
    %c0_44 = arith.constant 0 : index
    %c32 = arith.constant 32 : index
    %179 = vector.load %arg2[%c0_44, %c32] : memref<24x128xf32, #tpu.memory_space<vmem>>, vector<16x4xf32>
    tpu.vector_store %arg2[%c0_44, %c32], %178 {strides = array<i32>} : memref<24x128xf32, #tpu.memory_space<vmem>>, vector<16x4xf32>,
    %c88 = arith.constant 88 : index
    %c0_45 = arith.constant 0 : index
    %180 = vector.load %arg1[%c88, %c0_45] : memref<96x128xf32, #tpu.memory_space<vmem>>, vector<4x8xf32>
    %cst_46 = arith.constant dense<0.000000e+00> : vector<16x8xf32>
    %181 = tpu.matmul %178, %180, %cst_46 {dimension_numbers = #tpu.dot_dimension_numbers<[1], [0], [0], [1], [0, 0, 1, 1], [], []>} : vector<16x4xf32>, vector<4x8xf32>, vector<16x8xf32> -> vector<16x8xf32>
    %c16_47 = arith.constant 16 : index
    %c0_48 = arith.constant 0 : index
    %182 = vector.load %arg0[%c16_47, %c0_48] : memref<32x128xf32, #tpu.memory_space<vmem>>, vector<16x16xf32>
    %cst_49 = arith.constant dense<0.000000e+00> : vector<16x8xf32>
    %183 = tpu.matmul %182, %181, %cst_49 {dimension_numbers = #tpu.dot_dimension_numbers<[1], [0], [0], [1], [0, 0, 1, 1], [], []>} : vector<16x16xf32>, vector<16x8xf32>, vector<16x8xf32> -> vector<16x8xf32>
    %c0_50 = arith.constant 0 : index
    %c40_51 = arith.constant 40 : index
    %184 = vector.load %arg2[%c0_50, %c40_51] : memref<24x128xf32, #tpu.memory_space<vmem>>, vector<16x8xf32>
    tpu.vector_store %arg2[%c0_50, %c40_51], %183 {strides = array<i32>} : memref<24x128xf32, #tpu.memory_space<vmem>>, vector<16x8xf32>,
    return
  }
}

</mosaic_0001>

<llo_original>
// kernel: tpu_custom_call.1
$region0: #{tpu_custom_call.1}
  #allocation0 [shape = 'u32[]', space=smem, size = 0x4, offset = 0x4, fixed_abs, tag = 'smem constant byte address 0x4 - core index']
  #allocation1 [shape = 'u32[144,128]{1,0:T(1,128)}', space=vmem, size = 0x12000, scoped, tag = 'internal scratch']
  %s0 = inlined_call_operand.hbm [shape: f32[32,128], index: 0, kind: input, shape index: {}]
  %s1 = inlined_call_operand.hbm [shape: f32[96,128], index: 1, kind: input, shape index: {}]
  %s2 = inlined_call_operand.hbm [shape: f32[24,128], index: 2, kind: output, shape index: {}]
  %s3 = sld [smem:[#allocation0]]
  $region26: #{tpu_custom_call.1} parent=0
    _
  %s5 = ssub.s32 1, %s3
  %s6 = scalar_select 0, %s5, %s3
  $region1: #{tpu_custom_call.1} parent=0
    #allocation2 [shape = 'u8[16384]{0}', space=vmem, size = 0x4000, scoped, tag = 'input window, operand 0, single buffered']
    #allocation3 [shape = 's32[1]{0}', space=sflag, size = 0x4, scoped, tag = 'scoped memory for tpu_custom_call.1']
    #allocation4 [shape = 's32[1]{0}', space=sflag, size = 0x4, scoped, tag = 'scoped memory for tpu_custom_call.1']
    #allocation5 [shape = 'u8[49152]{0}', space=vmem, size = 0xc000, scoped, tag = 'input window, operand 1, single buffered']
    #allocation6 [shape = 's32[1]{0}', space=sflag, size = 0x4, scoped, tag = 'scoped memory for tpu_custom_call.1']
    #allocation7 [shape = 'u8[12288]{0}', space=vmem, size = 0x3000, scoped, tag = 'output window, operand 0, single buffered']
    %7 = vsyncpa [#allocation3], 0
    %8 = vsyncpa [#allocation6], 0
    %9 = vsyncpa [#allocation4], 0
    // Predicated region
    $region2: #{tpu_custom_call.1} parent=1 // pred_check
      _
    $region3: #{tpu_custom_call.1} parent=1 // pred_check_branch
      %11 = sbr.rel (0) target = $region5
    $region4: #{tpu_custom_call.1} parent=1 // pred_region
      %s13 = ssub.s32 512, 512
      %14 = vsyncadd [#allocation3], %s13
      %s15 = sshll.u32 [#allocation2], 4
      %s16 = int_to_ptr.vmem [resolvable:$true] %s15
      %21 = dma.hbm_to_vmem [thread:$0]  %s0, 512, %s16, [#allocation3], 128, 128, 8
    $region5: #{tpu_custom_call.1} parent=1 // pred_fallthru
      _
    // Predicated region
    $region6: #{tpu_custom_call.1} parent=1 // pred_check
      _
    $region7: #{tpu_custom_call.1} parent=1 // pred_check_branch
      %23 = sbr.rel (0) target = $region9
    $region8: #{tpu_custom_call.1} parent=1 // pred_region
      %s25 = ssub.s32 1536, 1536
      %26 = vsyncadd [#allocation6], %s25
      %s27 = sshll.u32 [#allocation5], 4
      %s28 = int_to_ptr.vmem [resolvable:$true] %s27
      %33 = dma.hbm_to_vmem [thread:$0]  %s1, 1536, %s28, [#allocation6], 128, 128, 8
    $region9: #{tpu_custom_call.1} parent=1 // pred_fallthru
      _
    // Predicated region
    $region10: #{tpu_custom_call.1} parent=1 // pred_check
      _
    $region11: #{tpu_custom_call.1} parent=1 // pred_check_branch
      %35 = sbr.rel (0) target = $region13
    $region12: #{tpu_custom_call.1} parent=1 // pred_region
      %36 = dma.done [#allocation3], 512
    $region13: #{tpu_custom_call.1} parent=1 // pred_fallthru
      _
    // Predicated region
    $region14: #{tpu_custom_call.1} parent=1 // pred_check
      _
    $region15: #{tpu_custom_call.1} parent=1 // pred_check_branch
      %38 = sbr.rel (0) target = $region17
    $region16: #{tpu_custom_call.1} parent=1 // pred_region
      %39 = dma.done [#allocation6], 1536
    $region17: #{tpu_custom_call.1} parent=1 // pred_fallthru
      _
    %40 = vst [vmem:[#allocation7] sm:$0xff] 0.0
    %41 = vst [vmem:[#allocation7 + $0x8] sm:$0xff] 0.0
    %42 = vst [vmem:[#allocation7 + $0x10] sm:$0xff] 0.0
    %v43 = vld [vmem:[#allocation5] sm:$0xff]
    %v44 = vld [vmem:[#allocation5 + $0x8] sm:$0xff]
    %v45 = vld [vmem:[#allocation5 + $0x10] sm:$0xff]
    %v46 = vld [vmem:[#allocation5 + $0x18] sm:$0xff]
    %v47 = vld [vmem:[#allocation5 + $0x20] sm:$0xff]
    %v48 = vld [vmem:[#allocation5 + $0x28] sm:$0x1]
    %v49 = vld [vmem:[#allocation2] sm:$0xff]
    %v50 = vld [vmem:[#allocation2 + $0x8] sm:$0xff]
    %v51 = vlaneseq
    %v52 = vshrl.u32 %v51, 7
    %v53 = vsub.s32 0, %v52
    %v54 = vrot.slane %v48, %v53
    %vm55 = vcmask 64512
    %v57 = vsel %vm55, %v49, 0
    %v60 = vsel %vm55, %v50, 0
    %62 = vmatprep.subr.mxu0 0.0
    %63 = vmatpush1.msra.mxu0 %v43
    %64 = vmatprep.subr.mxu0 0.0
    %65 = vmatpush1.msra.mxu0 0.0
    %66 = vmatprep.subr.mxu0 0.0
    %67 = vmatpush1.msra.mxu0 0.0
    %68 = vmatprep.subr.mxu0 0.0
    %69 = vmatpush1.msra.mxu0 0.0
    %70 = vmatprep.subr.mxu0 0.0
    %71 = vmatpush1.msra.mxu0 0.0
    %72 = vmatprep.subr.mxu0 0.0
    %73 = vmatpush1.msra.mxu0 0.0
    %74 = vmatprep.subr.mxu0 0.0
    %75 = vmatpush1.msra.mxu0 0.0
    %76 = vmatprep.subr.mxu0 0.0
    %77 = vmatpush1.msra.mxu0 0.0
    %78 = vmatprep.subr.mxu0 0.0
    %79 = vmatpush1.msra.mxu0 0.0
    %80 = vmatprep.subr.mxu0 0.0
    %81 = vmatpush1.msra.mxu0 0.0
    %82 = vmatprep.subr.mxu0 0.0
    %83 = vmatpush1.msra.mxu0 0.0
    %84 = vmatprep.subr.mxu0 0.0
    %85 = vmatpush1.msra.mxu0 0.0
    %86 = vmatprep.subr.mxu0 0.0
    %87 = vmatpush1.msra.mxu0 0.0
    %88 = vmatprep.subr.mxu0 0.0
    %89 = vmatpush1.msra.mxu0 0.0
    %90 = vmatprep.subr.mxu0 0.0
    %91 = vmatpush1.msra.mxu0 0.0
    %92 = vmatprep.subr.mxu0 0.0
    %93 = vmatpush1.msra.mxu0 0.0
    %94 = vmatprep.subr.mxu0 0.0
    %95 = vmatpush1.msra.mxu0 0.0
    %96 = vmatprep.subr.mxu0 0.0
    %97 = vmatpush1.msra.mxu0 0.0
    %98 = vmatprep.subr.mxu0 0.0
    %99 = vmatpush1.msra.mxu0 0.0
    %100 = vmatprep.subr.mxu0 0.0
    %101 = vmatpush1.msra.mxu0 0.0
    %102 = vmatprep.subr.mxu0 0.0
    %103 = vmatpush1.msra.mxu0 0.0
    %104 = vmatprep.subr.mxu0 0.0
    %105 = vmatpush1.msra.mxu0 0.0
    %106 = vmatprep.subr.mxu0 0.0
    %107 = vmatpush1.msra.mxu0 0.0
    %108 = vmatprep.subr.mxu0 0.0
    %109 = vmatpush1.msra.mxu0 0.0
    %110 = vmatprep.subr.mxu0 0.0
    %111 = vmatpush1.msra.mxu0 0.0
    %112 = vmatprep.subr.mxu0 0.0
    %113 = vmatpush1.msra.mxu0 0.0
    %114 = vmatprep.subr.mxu0 0.0
    %115 = vmatpush1.msra.mxu0 0.0
    %116 = vmatprep.subr.mxu0 0.0
    %117 = vmatpush1.msra.mxu0 0.0
    %118 = vmatprep.subr.mxu0 0.0
    %119 = vmatpush1.msra.mxu0 0.0
    %120 = vmatprep.subr.mxu0 0.0
    %121 = vmatpush1.msra.mxu0 0.0
    %122 = vmatprep.subr.mxu0 0.0
    %123 = vmatpush1.msra.mxu0 0.0
    %124 = vmatprep.subr.mxu0 0.0
    %125 = vmatpush1.msra.mxu0 0.0
    %126 = vmatprep.mubr.f32.mxu0 0.0
    %127 = vmatmul.mubr.f32.gmra.mrb[0].mxu0 %v57
    %v128 = vpop.f32.mrb[0].mxu0
    %v129 = vadd.f32 %v54, %v128
    %v130 = vpop.f32.mrb[0].mxu0
    %131 = vmatprep.mubr.f32.mxu0 0.0
    %132 = vmatmul.mubr.f32.gmra.mrb[0].mxu0 %v60
    %v133 = vpop.f32.mrb[0].mxu0
    %v134 = vadd.f32 %v54, %v133
    %v135 = vpop.f32.mrb[0].mxu0
    %136 = vdwg.mxu0
    %vm137 = vcmask 261120
    %v139 = vsel %vm137, 0.0, 0
    %141 = vmatprep.subr.mxu0 0.0
    %142 = vmatpush1.msra.mxu0 %v44
    %143 = vmatprep.subr.mxu0 0.0
    %144 = vmatpush1.msra.mxu0 %v45
    %145 = vmatprep.subr.mxu0 0.0
    %146 = vmatpush1.msra.mxu0 %v46
    %147 = vmatprep.subr.mxu0 0.0
    %148 = vmatpush1.msra.mxu0 %v47
    %149 = vmatprep.subr.mxu0 0.0
    %150 = vmatpush1.msra.mxu0 0.0
    %151 = vmatprep.subr.mxu0 0.0
    %152 = vmatpush1.msra.mxu0 0.0
    %153 = vmatprep.subr.mxu0 0.0
    %154 = vmatpush1.msra.mxu0 0.0
    %155 = vmatprep.subr.mxu0 0.0
    %156 = vmatpush1.msra.mxu0 0.0
    %157 = vmatprep.subr.mxu0 0.0
    %158 = vmatpush1.msra.mxu0 0.0
    %159 = vmatprep.subr.mxu0 0.0
    %160 = vmatpush1.msra.mxu0 0.0
    %161 = vmatprep.subr.mxu0 0.0
    %162 = vmatpush1.msra.mxu0 0.0
    %163 = vmatprep.subr.mxu0 0.0
    %164 = vmatpush1.msra.mxu0 0.0
    %165 = vmatprep.subr.mxu0 0.0
    %166 = vmatpush1.msra.mxu0 0.0
    %167 = vmatprep.subr.mxu0 0.0
    %168 = vmatpush1.msra.mxu0 0.0
    %169 = vmatprep.subr.mxu0 0.0
    %170 = vmatpush1.msra.mxu0 0.0
    %171 = vmatprep.subr.mxu0 0.0
    %172 = vmatpush1.msra.mxu0 0.0
    %173 = vmatprep.subr.mxu0 0.0
    %174 = vmatpush1.msra.mxu0 0.0
    %175 = vmatprep.subr.mxu0 0.0
    %176 = vmatpush1.msra.mxu0 0.0
    %177 = vmatprep.subr.mxu0 0.0
    %178 = vmatpush1.msra.mxu0 0.0
    %179 = vmatprep.subr.mxu0 0.0
    %180 = vmatpush1.msra.mxu0 0.0
    %181 = vmatprep.subr.mxu0 0.0
    %182 = vmatpush1.msra.mxu0 0.0
    %183 = vmatprep.subr.mxu0 0.0
    %184 = vmatpush1.msra.mxu0 0.0
    %185 = vmatprep.subr.mxu0 0.0
    %186 = vmatpush1.msra.mxu0 0.0
    %187 = vmatprep.subr.mxu0 0.0
    %188 = vmatpush1.msra.mxu0 0.0
    %189 = vmatprep.subr.mxu0 0.0
    %190 = vmatpush1.msra.mxu0 0.0
    %191 = vmatprep.subr.mxu0 0.0
    %192 = vmatpush1.msra.mxu0 0.0
    %193 = vmatprep.subr.mxu0 0.0
    %194 = vmatpush1.msra.mxu0 0.0
    %195 = vmatprep.subr.mxu0 0.0
    %196 = vmatpush1.msra.mxu0 0.0
    %197 = vmatprep.subr.mxu0 0.0
    %198 = vmatpush1.msra.mxu0 0.0
    %199 = vmatprep.subr.mxu0 0.0
    %200 = vmatpush1.msra.mxu0 0.0
    %201 = vmatprep.subr.mxu0 0.0
    %202 = vmatpush1.msra.mxu0 0.0
    %203 = vmatprep.subr.mxu0 0.0
    %204 = vmatpush1.msra.mxu0 0.0
    %205 = vmatprep.mubr.f32.mxu0 0.0
    %206 = vmatmul.mubr.f32.gmra.mrb[0].mxu0 %v139
    %v207 = vpop.f32.mrb[0].mxu0
    %v208 = vadd.f32 0.0, %v207
    %v209 = vpop.f32.mrb[0].mxu0
    %210 = vdwg.mxu0
    %v211 = vadd.f32 %v129, %v208
    %v212 = vxor.u32 %v211, 2147483648
    %v213 = vmul.f32 %v212, 1.442695
    %v214 = vpow.pop %v213
    %v215 = vadd.f32 %v214, 1.0
    %v216 = vrcp.pop %v215
    %v217 = vmul.f32 1.0, %v216
    %v218 = vtanh.pop %v211
    %v219 = vmul.f32 %v217, 0.0
    %221 = vrot.lane.b32.xlu0 %v218, 64
    %v222 = vpop.permute.xlu0 %221
    %v224 = vmul.f32 %v217, %v222
    %226 = vrot.lane.b32.xlu0 %v224, 32
    %v227 = vpop.permute.xlu0 %226
    %v229 = vadd.f32 %v219, %v227
    %v230 = vtanh.pop %v229
    %232 = vrot.lane.b32.xlu0 %v230, 64
    %v233 = vpop.permute.xlu0 %232
    %v235 = vmul.f32 %v217, %v233
    %237 = vrot.lane.b32.xlu0 %v235, 32
    %v238 = vpop.permute.xlu0 %237
    %vm240 = vcmask 254976
    %241 = vst.msk [vmem:[#allocation7] sm:$0x3] %vm240, %v238
    %v242 = vsel %vm137, %v238, 0
    %244 = vmatprep.subr.mxu0 0.0
    %245 = vmatpush1.msra.mxu0 %v44
    %246 = vmatprep.subr.mxu0 0.0
    %247 = vmatpush1.msra.mxu0 %v45
    %248 = vmatprep.subr.mxu0 0.0
    %249 = vmatpush1.msra.mxu0 %v46
    %250 = vmatprep.subr.mxu0 0.0
    %251 = vmatpush1.msra.mxu0 %v47
    %252 = vmatprep.subr.mxu0 0.0
    %253 = vmatpush1.msra.mxu0 0.0
    %254 = vmatprep.subr.mxu0 0.0
    %255 = vmatpush1.msra.mxu0 0.0
    %256 = vmatprep.subr.mxu0 0.0
    %257 = vmatpush1.msra.mxu0 0.0
    %258 = vmatprep.subr.mxu0 0.0
    %259 = vmatpush1.msra.mxu0 0.0
    %260 = vmatprep.subr.mxu0 0.0
    %261 = vmatpush1.msra.mxu0 0.0
    %262 = vmatprep.subr.mxu0 0.0
    %263 = vmatpush1.msra.mxu0 0.0
    %264 = vmatprep.subr.mxu0 0.0
    %265 = vmatpush1.msra.mxu0 0.0
    %266 = vmatprep.subr.mxu0 0.0
    %267 = vmatpush1.msra.mxu0 0.0
    %268 = vmatprep.subr.mxu0 0.0
    %269 = vmatpush1.msra.mxu0 0.0
    %270 = vmatprep.subr.mxu0 0.0
    %271 = vmatpush1.msra.mxu0 0.0
    %272 = vmatprep.subr.mxu0 0.0
    %273 = vmatpush1.msra.mxu0 0.0
    %274 = vmatprep.subr.mxu0 0.0
    %275 = vmatpush1.msra.mxu0 0.0
    %276 = vmatprep.subr.mxu0 0.0
    %277 = vmatpush1.msra.mxu0 0.0
    %278 = vmatprep.subr.mxu0 0.0
    %279 = vmatpush1.msra.mxu0 0.0
    %280 = vmatprep.subr.mxu0 0.0
    %281 = vmatpush1.msra.mxu0 0.0
    %282 = vmatprep.subr.mxu0 0.0
    %283 = vmatpush1.msra.mxu0 0.0
    %284 = vmatprep.subr.mxu0 0.0
    %285 = vmatpush1.msra.mxu0 0.0
    %286 = vmatprep.subr.mxu0 0.0
    %287 = vmatpush1.msra.mxu0 0.0
    %288 = vmatprep.subr.mxu0 0.0
    %289 = vmatpush1.msra.mxu0 0.0
    %290 = vmatprep.subr.mxu0 0.0
    %291 = vmatpush1.msra.mxu0 0.0
    %292 = vmatprep.subr.mxu0 0.0
    %293 = vmatpush1.msra.mxu0 0.0
    %294 = vmatprep.subr.mxu0 0.0
    %295 = vmatpush1.msra.mxu0 0.0
    %296 = vmatprep.subr.mxu0 0.0
    %297 = vmatpush1.msra.mxu0 0.0
    %298 = vmatprep.subr.mxu0 0.0
    %299 = vmatpush1.msra.mxu0 0.0
    %300 = vmatprep.subr.mxu0 0.0
    %301 = vmatpush1.msra.mxu0 0.0
    %302 = vmatprep.subr.mxu0 0.0
    %303 = vmatpush1.msra.mxu0 0.0
    %304 = vmatprep.subr.mxu0 0.0
    %305 = vmatpush1.msra.mxu0 0.0
    %306 = vmatprep.subr.mxu0 0.0
    %307 = vmatpush1.msra.mxu0 0.0
    %308 = vmatprep.mubr.f32.mxu0 0.0
    %309 = vmatmul.mubr.f32.gmra.mrb[0].mxu0 %v242
    %v310 = vpop.f32.mrb[0].mxu0
    %v311 = vadd.f32 0.0, %v310
    %v312 = vpop.f32.mrb[0].mxu0
    %313 = vdwg.mxu0
    %v315 = vrot.slane %v311, 6
    %v317 = vadd.f32 %v129, %v315
    %v318 = vxor.u32 %v317, 2147483648
    %v319 = vmul.f32 %v318, 1.442695
    %v320 = vpow.pop %v319
    %v321 = vadd.f32 %v320, 1.0
    %v322 = vrcp.pop %v321
    %v323 = vmul.f32 1.0, %v322
    %v324 = vtanh.pop %v317
    %v326 = vrot.slane %v229, 6
    %v328 = vmul.f32 %v323, %v326
    %330 = vrot.lane.b32.xlu0 %v324, 64
    %v331 = vpop.permute.xlu0 %330
    %v333 = vmul.f32 %v323, %v331
    %335 = vrot.lane.b32.xlu0 %v333, 32
    %v336 = vpop.permute.xlu0 %335
    %v338 = vadd.f32 %v328, %v336
    %v339 = vtanh.pop %v338
    %341 = vrot.lane.b32.xlu0 %v339, 64
    %v342 = vpop.permute.xlu0 %341
    %v344 = vmul.f32 %v323, %v342
    %346 = vrot.lane.b32.xlu0 %v344, 32
    %v347 = vpop.permute.xlu0 %346
    %vm349 = vcmask 257026
    %350 = vst.msk [vmem:[#allocation7] sm:$0xc] %vm349, %v347
    %v351 = vrot.slane %v344, 2
    %352 = vrot.lane.b32.xlu0 %v351, 32
    %v353 = vpop.permute.xlu0 %352
    %v354 = vsel %vm137, %v353, 0
    %356 = vmatprep.subr.mxu0 0.0
    %357 = vmatpush1.msra.mxu0 %v44
    %358 = vmatprep.subr.mxu0 0.0
    %359 = vmatpush1.msra.mxu0 %v45
    %360 = vmatprep.subr.mxu0 0.0
    %361 = vmatpush1.msra.mxu0 %v46
    %362 = vmatprep.subr.mxu0 0.0
    %363 = vmatpush1.msra.mxu0 %v47
    %364 = vmatprep.subr.mxu0 0.0
    %365 = vmatpush1.msra.mxu0 0.0
    %366 = vmatprep.subr.mxu0 0.0
    %367 = vmatpush1.msra.mxu0 0.0
    %368 = vmatprep.subr.mxu0 0.0
    %369 = vmatpush1.msra.mxu0 0.0
    %370 = vmatprep.subr.mxu0 0.0
    %371 = vmatpush1.msra.mxu0 0.0
    %372 = vmatprep.subr.mxu0 0.0
    %373 = vmatpush1.msra.mxu0 0.0
    %374 = vmatprep.subr.mxu0 0.0
    %375 = vmatpush1.msra.mxu0 0.0
    %376 = vmatprep.subr.mxu0 0.0
    %377 = vmatpush1.msra.mxu0 0.0
    %378 = vmatprep.subr.mxu0 0.0
    %379 = vmatpush1.msra.mxu0 0.0
    %380 = vmatprep.subr.mxu0 0.0
    %381 = vmatpush1.msra.mxu0 0.0
    %382 = vmatprep.subr.mxu0 0.0
    %383 = vmatpush1.msra.mxu0 0.0
    %384 = vmatprep.subr.mxu0 0.0
    %385 = vmatpush1.msra.mxu0 0.0
    %386 = vmatprep.subr.mxu0 0.0
    %387 = vmatpush1.msra.mxu0 0.0
    %388 = vmatprep.subr.mxu0 0.0
    %389 = vmatpush1.msra.mxu0 0.0
    %390 = vmatprep.subr.mxu0 0.0
    %391 = vmatpush1.msra.mxu0 0.0
    %392 = vmatprep.subr.mxu0 0.0
    %393 = vmatpush1.msra.mxu0 0.0
    %394 = vmatprep.subr.mxu0 0.0
    %395 = vmatpush1.msra.mxu0 0.0
    %396 = vmatprep.subr.mxu0 0.0
    %397 = vmatpush1.msra.mxu0 0.0
    %398 = vmatprep.subr.mxu0 0.0
    %399 = vmatpush1.msra.mxu0 0.0
    %400 = vmatprep.subr.mxu0 0.0
    %401 = vmatpush1.msra.mxu0 0.0
    %402 = vmatprep.subr.mxu0 0.0
    %403 = vmatpush1.msra.mxu0 0.0
    %404 = vmatprep.subr.mxu0 0.0
    %405 = vmatpush1.msra.mxu0 0.0
    %406 = vmatprep.subr.mxu0 0.0
    %407 = vmatpush1.msra.mxu0 0.0
    %408 = vmatprep.subr.mxu0 0.0
    %409 = vmatpush1.msra.mxu0 0.0
    %410 = vmatprep.subr.mxu0 0.0
    %411 = vmatpush1.msra.mxu0 0.0
    %412 = vmatprep.subr.mxu0 0.0
    %413 = vmatpush1.msra.mxu0 0.0
    %414 = vmatprep.subr.mxu0 0.0
    %415 = vmatpush1.msra.mxu0 0.0
    %416 = vmatprep.subr.mxu0 0.0
    %417 = vmatpush1.msra.mxu0 0.0
    %418 = vmatprep.subr.mxu0 0.0
    %419 = vmatpush1.msra.mxu0 0.0
    %420 = vmatprep.mubr.f32.mxu0 0.0
    %421 = vmatmul.mubr.f32.gmra.mrb[0].mxu0 %v354
    %v422 = vpop.f32.mrb[0].mxu0
    %v423 = vadd.f32 0.0, %v422
    %v424 = vpop.f32.mrb[0].mxu0
    %425 = vdwg.mxu0
    %v427 = vrot.slane %v423, 4
    %v429 = vadd.f32 %v129, %v427
    %v430 = vxor.u32 %v429, 2147483648
    %v431 = vmul.f32 %v430, 1.442695
    %v432 = vpow.pop %v431
    %v433 = vadd.f32 %v432, 1.0
    %v434 = vrcp.pop %v433
    %v435 = vmul.f32 1.0, %v434
    %v436 = vtanh.pop %v429
    %v438 = vrot.slane %v338, 6
    %v440 = vmul.f32 %v435, %v438
    %442 = vrot.lane.b32.xlu0 %v436, 64
    %v443 = vpop.permute.xlu0 %442
    %v445 = vmul.f32 %v435, %v443
    %447 = vrot.lane.b32.xlu0 %v445, 32
    %v448 = vpop.permute.xlu0 %447
    %v450 = vadd.f32 %v440, %v448
    %v451 = vtanh.pop %v450
    %453 = vrot.lane.b32.xlu0 %v451, 64
    %v454 = vpop.permute.xlu0 %453
    %v456 = vmul.f32 %v435, %v454
    %458 = vrot.lane.b32.xlu0 %v456, 32
    %v459 = vpop.permute.xlu0 %458
    %vm461 = vcmask 259076
    %462 = vst.msk [vmem:[#allocation7] sm:$0x30] %vm461, %v459
    %v463 = vrot.slane %v456, 4
    %464 = vrot.lane.b32.xlu0 %v463, 32
    %v465 = vpop.permute.xlu0 %464
    %v466 = vsel %vm137, %v465, 0
    %468 = vmatprep.subr.mxu0 0.0
    %469 = vmatpush1.msra.mxu0 %v44
    %470 = vmatprep.subr.mxu0 0.0
    %471 = vmatpush1.msra.mxu0 %v45
    %472 = vmatprep.subr.mxu0 0.0
    %473 = vmatpush1.msra.mxu0 %v46
    %474 = vmatprep.subr.mxu0 0.0
    %475 = vmatpush1.msra.mxu0 %v47
    %476 = vmatprep.subr.mxu0 0.0
    %477 = vmatpush1.msra.mxu0 0.0
    %478 = vmatprep.subr.mxu0 0.0
    %479 = vmatpush1.msra.mxu0 0.0
    %480 = vmatprep.subr.mxu0 0.0
    %481 = vmatpush1.msra.mxu0 0.0
    %482 = vmatprep.subr.mxu0 0.0
    %483 = vmatpush1.msra.mxu0 0.0
    %484 = vmatprep.subr.mxu0 0.0
    %485 = vmatpush1.msra.mxu0 0.0
    %486 = vmatprep.subr.mxu0 0.0
    %487 = vmatpush1.msra.mxu0 0.0
    %488 = vmatprep.subr.mxu0 0.0
    %489 = vmatpush1.msra.mxu0 0.0
    %490 = vmatprep.subr.mxu0 0.0
    %491 = vmatpush1.msra.mxu0 0.0
    %492 = vmatprep.subr.mxu0 0.0
    %493 = vmatpush1.msra.mxu0 0.0
    %494 = vmatprep.subr.mxu0 0.0
    %495 = vmatpush1.msra.mxu0 0.0
    %496 = vmatprep.subr.mxu0 0.0
    %497 = vmatpush1.msra.mxu0 0.0
    %498 = vmatprep.subr.mxu0 0.0
    %499 = vmatpush1.msra.mxu0 0.0
    %500 = vmatprep.subr.mxu0 0.0
    %501 = vmatpush1.msra.mxu0 0.0
    %502 = vmatprep.subr.mxu0 0.0
    %503 = vmatpush1.msra.mxu0 0.0
    %504 = vmatprep.subr.mxu0 0.0
    %505 = vmatpush1.msra.mxu0 0.0
    %506 = vmatprep.subr.mxu0 0.0
    %507 = vmatpush1.msra.mxu0 0.0
    %508 = vmatprep.subr.mxu0 0.0
    %509 = vmatpush1.msra.mxu0 0.0
    %510 = vmatprep.subr.mxu0 0.0
    %511 = vmatpush1.msra.mxu0 0.0
    %512 = vmatprep.subr.mxu0 0.0
    %513 = vmatpush1.msra.mxu0 0.0
    %514 = vmatprep.subr.mxu0 0.0
    %515 = vmatpush1.msra.mxu0 0.0
    %516 = vmatprep.subr.mxu0 0.0
    %517 = vmatpush1.msra.mxu0 0.0
    %518 = vmatprep.subr.mxu0 0.0
    %519 = vmatpush1.msra.mxu0 0.0
    %520 = vmatprep.subr.mxu0 0.0
    %521 = vmatpush1.msra.mxu0 0.0
    %522 = vmatprep.subr.mxu0 0.0
    %523 = vmatpush1.msra.mxu0 0.0
    %524 = vmatprep.subr.mxu0 0.0
    %525 = vmatpush1.msra.mxu0 0.0
    %526 = vmatprep.subr.mxu0 0.0
    %527 = vmatpush1.msra.mxu0 0.0
    %528 = vmatprep.subr.mxu0 0.0
    %529 = vmatpush1.msra.mxu0 0.0
    %530 = vmatprep.subr.mxu0 0.0
    %531 = vmatpush1.msra.mxu0 0.0
    %532 = vmatprep.mubr.f32.mxu0 0.0
    %533 = vmatmul.mubr.f32.gmra.mrb[0].mxu0 %v466
    %v534 = vpop.f32.mrb[0].mxu0
    %v535 = vadd.f32 0.0, %v534
    %v536 = vpop.f32.mrb[0].mxu0
    %537 = vdwg.mxu0
    %v539 = vrot.slane %v535, 2
    %v541 = vadd.f32 %v129, %v539
    %v542 = vxor.u32 %v541, 2147483648
    %v543 = vmul.f32 %v542, 1.442695
    %v544 = vpow.pop %v543
    %v545 = vadd.f32 %v544, 1.0
    %v546 = vrcp.pop %v545
    %v547 = vmul.f32 1.0, %v546
    %v548 = vtanh.pop %v541
    %v550 = vrot.slane %v450, 6
    %v552 = vmul.f32 %v547, %v550
    %554 = vrot.lane.b32.xlu0 %v548, 64
    %v555 = vpop.permute.xlu0 %554
    %v557 = vmul.f32 %v547, %v555
    %559 = vrot.lane.b32.xlu0 %v557, 32
    %v560 = vpop.permute.xlu0 %559
    %v562 = vadd.f32 %v552, %v560
    %v563 = vtanh.pop %v562
    %565 = vrot.lane.b32.xlu0 %v563, 64
    %v566 = vpop.permute.xlu0 %565
    %v568 = vmul.f32 %v547, %v566
    %570 = vrot.lane.b32.xlu0 %v568, 32
    %v571 = vpop.permute.xlu0 %570
    %vm573 = vcmask 261126
    %574 = vst.msk [vmem:[#allocation7] sm:$0xc0] %vm573, %v571
    %v575 = vrot.slane %v568, 6
    %576 = vrot.lane.b32.xlu0 %v575, 32
    %v577 = vpop.permute.xlu0 %576
    %v578 = vsel %vm137, %v577, 0
    %580 = vmatprep.subr.mxu0 0.0
    %581 = vmatpush1.msra.mxu0 %v44
    %582 = vmatprep.subr.mxu0 0.0
    %583 = vmatpush1.msra.mxu0 %v45
    %584 = vmatprep.subr.mxu0 0.0
    %585 = vmatpush1.msra.mxu0 %v46
    %586 = vmatprep.subr.mxu0 0.0
    %587 = vmatpush1.msra.mxu0 %v47
    %588 = vmatprep.subr.mxu0 0.0
    %589 = vmatpush1.msra.mxu0 0.0
    %590 = vmatprep.subr.mxu0 0.0
    %591 = vmatpush1.msra.mxu0 0.0
    %592 = vmatprep.subr.mxu0 0.0
    %593 = vmatpush1.msra.mxu0 0.0
    %594 = vmatprep.subr.mxu0 0.0
    %595 = vmatpush1.msra.mxu0 0.0
    %596 = vmatprep.subr.mxu0 0.0
    %597 = vmatpush1.msra.mxu0 0.0
    %598 = vmatprep.subr.mxu0 0.0
    %599 = vmatpush1.msra.mxu0 0.0
    %600 = vmatprep.subr.mxu0 0.0
    %601 = vmatpush1.msra.mxu0 0.0
    %602 = vmatprep.subr.mxu0 0.0
    %603 = vmatpush1.msra.mxu0 0.0
    %604 = vmatprep.subr.mxu0 0.0
    %605 = vmatpush1.msra.mxu0 0.0
    %606 = vmatprep.subr.mxu0 0.0
    %607 = vmatpush1.msra.mxu0 0.0
    %608 = vmatprep.subr.mxu0 0.0
    %609 = vmatpush1.msra.mxu0 0.0
    %610 = vmatprep.subr.mxu0 0.0
    %611 = vmatpush1.msra.mxu0 0.0
    %612 = vmatprep.subr.mxu0 0.0
    %613 = vmatpush1.msra.mxu0 0.0
    %614 = vmatprep.subr.mxu0 0.0
    %615 = vmatpush1.msra.mxu0 0.0
    %616 = vmatprep.subr.mxu0 0.0
    %617 = vmatpush1.msra.mxu0 0.0
    %618 = vmatprep.subr.mxu0 0.0
    %619 = vmatpush1.msra.mxu0 0.0
    %620 = vmatprep.subr.mxu0 0.0
    %621 = vmatpush1.msra.mxu0 0.0
    %622 = vmatprep.subr.mxu0 0.0
    %623 = vmatpush1.msra.mxu0 0.0
    %624 = vmatprep.subr.mxu0 0.0
    %625 = vmatpush1.msra.mxu0 0.0
    %626 = vmatprep.subr.mxu0 0.0
    %627 = vmatpush1.msra.mxu0 0.0
    %628 = vmatprep.subr.mxu0 0.0
    %629 = vmatpush1.msra.mxu0 0.0
    %630 = vmatprep.subr.mxu0 0.0
    %631 = vmatpush1.msra.mxu0 0.0
    %632 = vmatprep.subr.mxu0 0.0
    %633 = vmatpush1.msra.mxu0 0.0
    %634 = vmatprep.subr.mxu0 0.0
    %635 = vmatpush1.msra.mxu0 0.0
    %636 = vmatprep.subr.mxu0 0.0
    %637 = vmatpush1.msra.mxu0 0.0
    %638 = vmatprep.subr.mxu0 0.0
    %639 = vmatpush1.msra.mxu0 0.0
    %640 = vmatprep.subr.mxu0 0.0
    %641 = vmatpush1.msra.mxu0 0.0
    %642 = vmatprep.subr.mxu0 0.0
    %643 = vmatpush1.msra.mxu0 0.0
    %644 = vmatprep.mubr.f32.mxu0 0.0
    %645 = vmatmul.mubr.f32.gmra.mrb[0].mxu0 %v578
    %v646 = vpop.f32.mrb[0].mxu0
    %v647 = vadd.f32 0.0, %v646
    %v648 = vpop.f32.mrb[0].mxu0
    %649 = vdwg.mxu0
    %v650 = vadd.f32 %v134, %v647
    %v651 = vxor.u32 %v650, 2147483648
    %v652 = vmul.f32 %v651, 1.442695
    %v653 = vpow.pop %v652
    %v654 = vadd.f32 %v653, 1.0
    %v655 = vrcp.pop %v654
    %v656 = vmul.f32 1.0, %v655
    %v657 = vtanh.pop %v650
    %v659 = vrot.slane %v562, 6
    %v661 = vmul.f32 %v656, %v659
    %663 = vrot.lane.b32.xlu0 %v657, 64
    %v664 = vpop.permute.xlu0 %663
    %v666 = vmul.f32 %v656, %v664
    %668 = vrot.lane.b32.xlu0 %v666, 32
    %v669 = vpop.permute.xlu0 %668
    %v671 = vadd.f32 %v661, %v669
    %v672 = vtanh.pop %v671
    %674 = vrot.lane.b32.xlu0 %v672, 64
    %v675 = vpop.permute.xlu0 %674
    %v677 = vmul.f32 %v656, %v675
    %679 = vrot.lane.b32.xlu0 %v677, 32
    %v680 = vpop.permute.xlu0 %679
    %682 = vst.msk [vmem:[#allocation7 + $0x8] sm:$0x3] %vm240, %v680
    %v683 = vsel %vm137, %v680, 0
    %685 = vmatprep.subr.mxu0 0.0
    %686 = vmatpush1.msra.mxu0 %v44
    %687 = vmatprep.subr.mxu0 0.0
    %688 = vmatpush1.msra.mxu0 %v45
    %689 = vmatprep.subr.mxu0 0.0
    %690 = vmatpush1.msra.mxu0 %v46
    %691 = vmatprep.subr.mxu0 0.0
    %692 = vmatpush1.msra.mxu0 %v47
    %693 = vmatprep.subr.mxu0 0.0
    %694 = vmatpush1.msra.mxu0 0.0
    %695 = vmatprep.subr.mxu0 0.0
    %696 = vmatpush1.msra.mxu0 0.0
    %697 = vmatprep.subr.mxu0 0.0
    %698 = vmatpush1.msra.mxu0 0.0
    %699 = vmatprep.subr.mxu0 0.0
    %700 = vmatpush1.msra.mxu0 0.0
    %701 = vmatprep.subr.mxu0 0.0
    %702 = vmatpush1.msra.mxu0 0.0
    %703 = vmatprep.subr.mxu0 0.0
    %704 = vmatpush1.msra.mxu0 0.0
    %705 = vmatprep.subr.mxu0 0.0
    %706 = vmatpush1.msra.mxu0 0.0
    %707 = vmatprep.subr.mxu0 0.0
    %708 = vmatpush1.msra.mxu0 0.0
    %709 = vmatprep.subr.mxu0 0.0
    %710 = vmatpush1.msra.mxu0 0.0
    %711 = vmatprep.subr.mxu0 0.0
    %712 = vmatpush1.msra.mxu0 0.0
    %713 = vmatprep.subr.mxu0 0.0
    %714 = vmatpush1.msra.mxu0 0.0
    %715 = vmatprep.subr.mxu0 0.0
    %716 = vmatpush1.msra.mxu0 0.0
    %717 = vmatprep.subr.mxu0 0.0
    %718 = vmatpush1.msra.mxu0 0.0
    %719 = vmatprep.subr.mxu0 0.0
    %720 = vmatpush1.msra.mxu0 0.0
    %721 = vmatprep.subr.mxu0 0.0
    %722 = vmatpush1.msra.mxu0 0.0
    %723 = vmatprep.subr.mxu0 0.0
    %724 = vmatpush1.msra.mxu0 0.0
    %725 = vmatprep.subr.mxu0 0.0
    %726 = vmatpush1.msra.mxu0 0.0
    %727 = vmatprep.subr.mxu0 0.0
    %728 = vmatpush1.msra.mxu0 0.0
    %729 = vmatprep.subr.mxu0 0.0
    %730 = vmatpush1.msra.mxu0 0.0
    %731 = vmatprep.subr.mxu0 0.0
    %732 = vmatpush1.msra.mxu0 0.0
    %733 = vmatprep.subr.mxu0 0.0
    %734 = vmatpush1.msra.mxu0 0.0
    %735 = vmatprep.subr.mxu0 0.0
    %736 = vmatpush1.msra.mxu0 0.0
    %737 = vmatprep.subr.mxu0 0.0
    %738 = vmatpush1.msra.mxu0 0.0
    %739 = vmatprep.subr.mxu0 0.0
    %740 = vmatpush1.msra.mxu0 0.0
    %741 = vmatprep.subr.mxu0 0.0
    %742 = vmatpush1.msra.mxu0 0.0
    %743 = vmatprep.subr.mxu0 0.0
    %744 = vmatpush1.msra.mxu0 0.0
    %745 = vmatprep.subr.mxu0 0.0
    %746 = vmatpush1.msra.mxu0 0.0
    %747 = vmatprep.subr.mxu0 0.0
    %748 = vmatpush1.msra.mxu0 0.0
    %749 = vmatprep.mubr.f32.mxu0 0.0
    %750 = vmatmul.mubr.f32.gmra.mrb[0].mxu0 %v683
    %v751 = vpop.f32.mrb[0].mxu0
    %v752 = vadd.f32 0.0, %v751
    %v753 = vpop.f32.mrb[0].mxu0
    %754 = vdwg.mxu0
    %v756 = vrot.slane %v752, 6
    %v758 = vadd.f32 %v134, %v756
    %v759 = vxor.u32 %v758, 2147483648
    %v760 = vmul.f32 %v759, 1.442695
    %v761 = vpow.pop %v760
    %v762 = vadd.f32 %v761, 1.0
    %v763 = vrcp.pop %v762
    %v764 = vmul.f32 1.0, %v763
    %v765 = vtanh.pop %v758
    %v767 = vrot.slane %v671, 6
    %v769 = vmul.f32 %v764, %v767
    %771 = vrot.lane.b32.xlu0 %v765, 64
    %v772 = vpop.permute.xlu0 %771
    %v774 = vmul.f32 %v764, %v772
    %776 = vrot.lane.b32.xlu0 %v774, 32
    %v777 = vpop.permute.xlu0 %776
    %v779 = vadd.f32 %v769, %v777
    %v780 = vtanh.pop %v779
    %782 = vrot.lane.b32.xlu0 %v780, 64
    %v783 = vpop.permute.xlu0 %782
    %v785 = vmul.f32 %v764, %v783
    %787 = vrot.lane.b32.xlu0 %v785, 32
    %v788 = vpop.permute.xlu0 %787
    %790 = vst.msk [vmem:[#allocation7 + $0x8] sm:$0xc] %vm349, %v788
    %v791 = vrot.slane %v785, 2
    %792 = vrot.lane.b32.xlu0 %v791, 32
    %v793 = vpop.permute.xlu0 %792
    %v794 = vsel %vm137, %v793, 0
    %796 = vmatprep.subr.mxu0 0.0
    %797 = vmatpush1.msra.mxu0 %v44
    %798 = vmatprep.subr.mxu0 0.0
    %799 = vmatpush1.msra.mxu0 %v45
    %800 = vmatprep.subr.mxu0 0.0
    %801 = vmatpush1.msra.mxu0 %v46
    %802 = vmatprep.subr.mxu0 0.0
    %803 = vmatpush1.msra.mxu0 %v47
    %804 = vmatprep.subr.mxu0 0.0
    %805 = vmatpush1.msra.mxu0 0.0
    %806 = vmatprep.subr.mxu0 0.0
    %807 = vmatpush1.msra.mxu0 0.0
    %808 = vmatprep.subr.mxu0 0.0
    %809 = vmatpush1.msra.mxu0 0.0
    %810 = vmatprep.subr.mxu0 0.0
    %811 = vmatpush1.msra.mxu0 0.0
    %812 = vmatprep.subr.mxu0 0.0
    %813 = vmatpush1.msra.mxu0 0.0
    %814 = vmatprep.subr.mxu0 0.0
    %815 = vmatpush1.msra.mxu0 0.0
    %816 = vmatprep.subr.mxu0 0.0
    %817 = vmatpush1.msra.mxu0 0.0
    %818 = vmatprep.subr.mxu0 0.0
    %819 = vmatpush1.msra.mxu0 0.0
    %820 = vmatprep.subr.mxu0 0.0
    %821 = vmatpush1.msra.mxu0 0.0
    %822 = vmatprep.subr.mxu0 0.0
    %823 = vmatpush1.msra.mxu0 0.0
    %824 = vmatprep.subr.mxu0 0.0
    %825 = vmatpush1.msra.mxu0 0.0
    %826 = vmatprep.subr.mxu0 0.0
    %827 = vmatpush1.msra.mxu0 0.0
    %828 = vmatprep.subr.mxu0 0.0
    %829 = vmatpush1.msra.mxu0 0.0
    %830 = vmatprep.subr.mxu0 0.0
    %831 = vmatpush1.msra.mxu0 0.0
    %832 = vmatprep.subr.mxu0 0.0
    %833 = vmatpush1.msra.mxu0 0.0
    %834 = vmatprep.subr.mxu0 0.0
    %835 = vmatpush1.msra.mxu0 0.0
    %836 = vmatprep.subr.mxu0 0.0
    %837 = vmatpush1.msra.mxu0 0.0
    %838 = vmatprep.subr.mxu0 0.0
    %839 = vmatpush1.msra.mxu0 0.0
    %840 = vmatprep.subr.mxu0 0.0
    %841 = vmatpush1.msra.mxu0 0.0
    %842 = vmatprep.subr.mxu0 0.0
    %843 = vmatpush1.msra.mxu0 0.0
    %844 = vmatprep.subr.mxu0 0.0
    %845 = vmatpush1.msra.mxu0 0.0
    %846 = vmatprep.subr.mxu0 0.0
    %847 = vmatpush1.msra.mxu0 0.0
    %848 = vmatprep.subr.mxu0 0.0
    %849 = vmatpush1.msra.mxu0 0.0
    %850 = vmatprep.subr.mxu0 0.0
    %851 = vmatpush1.msra.mxu0 0.0
    %852 = vmatprep.subr.mxu0 0.0
    %853 = vmatpush1.msra.mxu0 0.0
    %854 = vmatprep.subr.mxu0 0.0
    %855 = vmatpush1.msra.mxu0 0.0
    %856 = vmatprep.subr.mxu0 0.0
    %857 = vmatpush1.msra.mxu0 0.0
    %858 = vmatprep.subr.mxu0 0.0
    %859 = vmatpush1.msra.mxu0 0.0
    %860 = vmatprep.mubr.f32.mxu0 0.0
    %861 = vmatmul.mubr.f32.gmra.mrb[0].mxu0 %v794
    %v862 = vpop.f32.mrb[0].mxu0
    %v863 = vadd.f32 0.0, %v862
    %v864 = vpop.f32.mrb[0].mxu0
    %865 = vdwg.mxu0
    %v867 = vrot.slane %v863, 4
    %v869 = vadd.f32 %v134, %v867
    %v870 = vxor.u32 %v869, 2147483648
    %v871 = vmul.f32 %v870, 1.442695
    %v872 = vpow.pop %v871
    %v873 = vadd.f32 %v872, 1.0
    %v874 = vrcp.pop %v873
    %v875 = vmul.f32 1.0, %v874
    %v876 = vtanh.pop %v869
    %v878 = vrot.slane %v779, 6
    %v880 = vmul.f32 %v875, %v878
    %882 = vrot.lane.b32.xlu0 %v876, 64
    %v883 = vpop.permute.xlu0 %882
    %v885 = vmul.f32 %v875, %v883
    %887 = vrot.lane.b32.xlu0 %v885, 32
    %v888 = vpop.permute.xlu0 %887
    %v890 = vadd.f32 %v880, %v888
    %v891 = vtanh.pop %v890
    %893 = vrot.lane.b32.xlu0 %v891, 64
    %v894 = vpop.permute.xlu0 %893
    %v896 = vmul.f32 %v875, %v894
    %898 = vrot.lane.b32.xlu0 %v896, 32
    %v899 = vpop.permute.xlu0 %898
    %901 = vst.msk [vmem:[#allocation7 + $0x8] sm:$0x30] %vm461, %v899
    %v902 = vrot.slane %v896, 4
    %903 = vrot.lane.b32.xlu0 %v902, 32
    %v904 = vpop.permute.xlu0 %903
    %v905 = vsel %vm137, %v904, 0
    %907 = vmatprep.subr.mxu0 0.0
    %908 = vmatpush1.msra.mxu0 %v44
    %909 = vmatprep.subr.mxu0 0.0
    %910 = vmatpush1.msra.mxu0 %v45
    %911 = vmatprep.subr.mxu0 0.0
    %912 = vmatpush1.msra.mxu0 %v46
    %913 = vmatprep.subr.mxu0 0.0
    %914 = vmatpush1.msra.mxu0 %v47
    %915 = vmatprep.subr.mxu0 0.0
    %916 = vmatpush1.msra.mxu0 0.0
    %917 = vmatprep.subr.mxu0 0.0
    %918 = vmatpush1.msra.mxu0 0.0
    %919 = vmatprep.subr.mxu0 0.0
    %920 = vmatpush1.msra.mxu0 0.0
    %921 = vmatprep.subr.mxu0 0.0
    %922 = vmatpush1.msra.mxu0 0.0
    %923 = vmatprep.subr.mxu0 0.0
    %924 = vmatpush1.msra.mxu0 0.0
    %925 = vmatprep.subr.mxu0 0.0
    %926 = vmatpush1.msra.mxu0 0.0
    %927 = vmatprep.subr.mxu0 0.0
    %928 = vmatpush1.msra.mxu0 0.0
    %929 = vmatprep.subr.mxu0 0.0
    %930 = vmatpush1.msra.mxu0 0.0
    %931 = vmatprep.subr.mxu0 0.0
    %932 = vmatpush1.msra.mxu0 0.0
    %933 = vmatprep.subr.mxu0 0.0
    %934 = vmatpush1.msra.mxu0 0.0
    %935 = vmatprep.subr.mxu0 0.0
    %936 = vmatpush1.msra.mxu0 0.0
    %937 = vmatprep.subr.mxu0 0.0
    %938 = vmatpush1.msra.mxu0 0.0
    %939 = vmatprep.subr.mxu0 0.0
    %940 = vmatpush1.msra.mxu0 0.0
    %941 = vmatprep.subr.mxu0 0.0
    %942 = vmatpush1.msra.mxu0 0.0
    %943 = vmatprep.subr.mxu0 0.0
    %944 = vmatpush1.msra.mxu0 0.0
    %945 = vmatprep.subr.mxu0 0.0
    %946 = vmatpush1.msra.mxu0 0.0
    %947 = vmatprep.subr.mxu0 0.0
    %948 = vmatpush1.msra.mxu0 0.0
    %949 = vmatprep.subr.mxu0 0.0
    %950 = vmatpush1.msra.mxu0 0.0
    %951 = vmatprep.subr.mxu0 0.0
    %952 = vmatpush1.msra.mxu0 0.0
    %953 = vmatprep.subr.mxu0 0.0
    %954 = vmatpush1.msra.mxu0 0.0
    %955 = vmatprep.subr.mxu0 0.0
    %956 = vmatpush1.msra.mxu0 0.0
    %957 = vmatprep.subr.mxu0 0.0
    %958 = vmatpush1.msra.mxu0 0.0
    %959 = vmatprep.subr.mxu0 0.0
    %960 = vmatpush1.msra.mxu0 0.0
    %961 = vmatprep.subr.mxu0 0.0
    %962 = vmatpush1.msra.mxu0 0.0
    %963 = vmatprep.subr.mxu0 0.0
    %964 = vmatpush1.msra.mxu0 0.0
    %965 = vmatprep.subr.mxu0 0.0
    %966 = vmatpush1.msra.mxu0 0.0
    %967 = vmatprep.subr.mxu0 0.0
    %968 = vmatpush1.msra.mxu0 0.0
    %969 = vmatprep.subr.mxu0 0.0
    %970 = vmatpush1.msra.mxu0 0.0
    %971 = vmatprep.mubr.f32.mxu0 0.0
    %972 = vmatmul.mubr.f32.gmra.mrb[0].mxu0 %v905
    %v973 = vpop.f32.mrb[0].mxu0
    %v974 = vadd.f32 0.0, %v973
    %v975 = vpop.f32.mrb[0].mxu0
    %976 = vdwg.mxu0
    %v978 = vrot.slane %v974, 2
    %v980 = vadd.f32 %v134, %v978
    %v981 = vxor.u32 %v980, 2147483648
    %v982 = vmul.f32 %v981, 1.442695
    %v983 = vpow.pop %v982
    %v984 = vadd.f32 %v983, 1.0
    %v985 = vrcp.pop %v984
    %v986 = vmul.f32 1.0, %v985
    %v987 = vtanh.pop %v980
    %v989 = vrot.slane %v890, 6
    %v991 = vmul.f32 %v986, %v989
    %993 = vrot.lane.b32.xlu0 %v987, 64
    %v994 = vpop.permute.xlu0 %993
    %v996 = vmul.f32 %v986, %v994
    %998 = vrot.lane.b32.xlu0 %v996, 32
    %v999 = vpop.permute.xlu0 %998
    %v1001 = vadd.f32 %v991, %v999
    %v1002 = vtanh.pop %v1001
    %1004 = vrot.lane.b32.xlu0 %v1002, 64
    %v1005 = vpop.permute.xlu0 %1004
    %v1007 = vmul.f32 %v986, %v1005
    %1009 = vrot.lane.b32.xlu0 %v1007, 32
    %v1010 = vpop.permute.xlu0 %1009
    %1012 = vst.msk [vmem:[#allocation7 + $0x8] sm:$0xc0] %vm573, %v1010
    %1014 = vrot.lane.b32.xlu0 %v1001, 96
    %v1015 = vpop.permute.xlu0 %1014
    %1017 = vst.msk [vmem:[#allocation7 + $0xa] sm:$0xc0] %vm573, %v1015
    %v1018 = vld [vmem:[#allocation7] sm:$0xff]
    %v1019 = vld [vmem:[#allocation7 + $0x8] sm:$0xff]
    %v1020 = vld [vmem:[#allocation5 + $0x30] sm:$0xff]
    %v1021 = vld [vmem:[#allocation5 + $0x38] sm:$0xff]
    %v1022 = vld [vmem:[#allocation5 + $0x40] sm:$0xff]
    %v1023 = vld [vmem:[#allocation5 + $0x48] sm:$0xff]
    %v1024 = vld [vmem:[#allocation5 + $0x50] sm:$0x1]
    %v1025 = vlaneseq
    %v1026 = vshrl.u32 %v1025, 7
    %v1027 = vsub.s32 0, %v1026
    %v1028 = vrot.slane %v1024, %v1027
    %v1030 = vsel %vm137, %v1018, 0
    %v1033 = vsel %vm137, %v1019, 0
    %1035 = vmatprep.subr.mxu0 0.0
    %1036 = vmatpush1.msra.mxu0 %v1020
    %1037 = vmatprep.subr.mxu0 0.0
    %1038 = vmatpush1.msra.mxu0 %v1021
    %1039 = vmatprep.subr.mxu0 0.0
    %1040 = vmatpush1.msra.mxu0 %v1022
    %1041 = vmatprep.subr.mxu0 0.0
    %1042 = vmatpush1.msra.mxu0 %v1023
    %1043 = vmatprep.subr.mxu0 0.0
    %1044 = vmatpush1.msra.mxu0 0.0
    %1045 = vmatprep.subr.mxu0 0.0
    %1046 = vmatpush1.msra.mxu0 0.0
    %1047 = vmatprep.subr.mxu0 0.0
    %1048 = vmatpush1.msra.mxu0 0.0
    %1049 = vmatprep.subr.mxu0 0.0
    %1050 = vmatpush1.msra.mxu0 0.0
    %1051 = vmatprep.subr.mxu0 0.0
    %1052 = vmatpush1.msra.mxu0 0.0
    %1053 = vmatprep.subr.mxu0 0.0
    %1054 = vmatpush1.msra.mxu0 0.0
    %1055 = vmatprep.subr.mxu0 0.0
    %1056 = vmatpush1.msra.mxu0 0.0
    %1057 = vmatprep.subr.mxu0 0.0
    %1058 = vmatpush1.msra.mxu0 0.0
    %1059 = vmatprep.subr.mxu0 0.0
    %1060 = vmatpush1.msra.mxu0 0.0
    %1061 = vmatprep.subr.mxu0 0.0
    %1062 = vmatpush1.msra.mxu0 0.0
    %1063 = vmatprep.subr.mxu0 0.0
    %1064 = vmatpush1.msra.mxu0 0.0
    %1065 = vmatprep.subr.mxu0 0.0
    %1066 = vmatpush1.msra.mxu0 0.0
    %1067 = vmatprep.subr.mxu0 0.0
    %1068 = vmatpush1.msra.mxu0 0.0
    %1069 = vmatprep.subr.mxu0 0.0
    %1070 = vmatpush1.msra.mxu0 0.0
    %1071 = vmatprep.subr.mxu0 0.0
    %1072 = vmatpush1.msra.mxu0 0.0
    %1073 = vmatprep.subr.mxu0 0.0
    %1074 = vmatpush1.msra.mxu0 0.0
    %1075 = vmatprep.subr.mxu0 0.0
    %1076 = vmatpush1.msra.mxu0 0.0
    %1077 = vmatprep.subr.mxu0 0.0
    %1078 = vmatpush1.msra.mxu0 0.0
    %1079 = vmatprep.subr.mxu0 0.0
    %1080 = vmatpush1.msra.mxu0 0.0
    %1081 = vmatprep.subr.mxu0 0.0
    %1082 = vmatpush1.msra.mxu0 0.0
    %1083 = vmatprep.subr.mxu0 0.0
    %1084 = vmatpush1.msra.mxu0 0.0
    %1085 = vmatprep.subr.mxu0 0.0
    %1086 = vmatpush1.msra.mxu0 0.0
    %1087 = vmatprep.subr.mxu0 0.0
    %1088 = vmatpush1.msra.mxu0 0.0
    %1089 = vmatprep.subr.mxu0 0.0
    %1090 = vmatpush1.msra.mxu0 0.0
    %1091 = vmatprep.subr.mxu0 0.0
    %1092 = vmatpush1.msra.mxu0 0.0
    %1093 = vmatprep.subr.mxu0 0.0
    %1094 = vmatpush1.msra.mxu0 0.0
    %1095 = vmatprep.subr.mxu0 0.0
    %1096 = vmatpush1.msra.mxu0 0.0
    %1097 = vmatprep.subr.mxu0 0.0
    %1098 = vmatpush1.msra.mxu0 0.0
    %1099 = vmatprep.mubr.f32.mxu0 0.0
    %1100 = vmatmul.mubr.f32.gmra.mrb[0].mxu0 %v1030
    %v1101 = vpop.f32.mrb[0].mxu0
    %v1102 = vadd.f32 %v1028, %v1101
    %v1103 = vpop.f32.mrb[0].mxu0
    %1104 = vmatprep.mubr.f32.mxu0 0.0
    %1105 = vmatmul.mubr.f32.gmra.mrb[0].mxu0 %v1033
    %v1106 = vpop.f32.mrb[0].mxu0
    %v1107 = vadd.f32 %v1028, %v1106
    %v1108 = vpop.f32.mrb[0].mxu0
    %1109 = vdwg.mxu0
    %vm1110 = vcmask 31744
    %v1111 = vsel %vm1110, %v1102, -inf
    %1112 = vmax.xlane.f32.xlu0 %v1111
    %v1113 = vpop.xlane.xlu0 %1112
    %v1114 = vsel %vm1110, %v1107, -inf
    %1115 = vmax.xlane.f32.xlu0 %v1114
    %v1116 = vpop.xlane.xlu0 %1115
    %v1117 = vsub.f32 %v1102, %v1113
    %v1118 = vsub.f32 %v1107, %v1116
    %v1119 = vmul.f32 %v1117, 1.442695
    %v1120 = vpow.pop %v1119
    %v1121 = vmul.f32 %v1118, 1.442695
    %v1122 = vpow.pop %v1121
    %v1123 = vsel %vm1110, %v1120, 0.0
    %1124 = vadd.xlane.f32.xlu0 %v1123
    %v1125 = vpop.xlane.xlu0 %1124
    %v1126 = vsel %vm1110, %v1122, 0.0
    %1127 = vadd.xlane.f32.xlu0 %v1126
    %v1128 = vpop.xlane.xlu0 %1127
    %v1129 = vrcp.pop %v1125
    %v1130 = vmul.f32 %v1120, %v1129
    %v1131 = vrcp.pop %v1128
    %v1132 = vmul.f32 %v1122, %v1131
    %1135 = vrot.lane.b32.xlu0 %v1130, 32
    %v1136 = vpop.permute.xlu0 %1135
    %1137 = vrot.lane.b32.xlu0 %v1132, 32
    %v1138 = vpop.permute.xlu0 %1137
    %vm1141 = vcmask 294144
    %1142 = vst.msk [vmem:[#allocation7] sm:$0xff] %vm1141, %v1136
    %1143 = vst.msk [vmem:[#allocation7 + $0x8] sm:$0xff] %vm1141, %v1138
    %v1144 = vld [vmem:[#allocation5 + $0x58] sm:$0xf]
    %v1145 = vsel %vm1110, %v1130, 0
    %v1147 = vsel %vm1110, %v1132, 0
    %vm1149 = vcmask 1043456
    %v1151 = vsel %vm1149, %v1144, 0
    %1153 = vmatprep.subr.mxu0 0.0
    %1154 = vmatpush1.msra.mxu0 %v1151
    %1155 = vmatprep.subr.mxu0 0.0
    %1156 = vmatpush1.msra.mxu0 0.0
    %1157 = vmatprep.subr.mxu0 0.0
    %1158 = vmatpush1.msra.mxu0 0.0
    %1159 = vmatprep.subr.mxu0 0.0
    %1160 = vmatpush1.msra.mxu0 0.0
    %1161 = vmatprep.subr.mxu0 0.0
    %1162 = vmatpush1.msra.mxu0 0.0
    %1163 = vmatprep.subr.mxu0 0.0
    %1164 = vmatpush1.msra.mxu0 0.0
    %1165 = vmatprep.subr.mxu0 0.0
    %1166 = vmatpush1.msra.mxu0 0.0
    %1167 = vmatprep.subr.mxu0 0.0
    %1168 = vmatpush1.msra.mxu0 0.0
    %1169 = vmatprep.subr.mxu0 0.0
    %1170 = vmatpush1.msra.mxu0 0.0
    %1171 = vmatprep.subr.mxu0 0.0
    %1172 = vmatpush1.msra.mxu0 0.0
    %1173 = vmatprep.subr.mxu0 0.0
    %1174 = vmatpush1.msra.mxu0 0.0
    %1175 = vmatprep.subr.mxu0 0.0
    %1176 = vmatpush1.msra.mxu0 0.0
    %1177 = vmatprep.subr.mxu0 0.0
    %1178 = vmatpush1.msra.mxu0 0.0
    %1179 = vmatprep.subr.mxu0 0.0
    %1180 = vmatpush1.msra.mxu0 0.0
    %1181 = vmatprep.subr.mxu0 0.0
    %1182 = vmatpush1.msra.mxu0 0.0
    %1183 = vmatprep.subr.mxu0 0.0
    %1184 = vmatpush1.msra.mxu0 0.0
    %1185 = vmatprep.subr.mxu0 0.0
    %1186 = vmatpush1.msra.mxu0 0.0
    %1187 = vmatprep.subr.mxu0 0.0
    %1188 = vmatpush1.msra.mxu0 0.0
    %1189 = vmatprep.subr.mxu0 0.0
    %1190 = vmatpush1.msra.mxu0 0.0
    %1191 = vmatprep.subr.mxu0 0.0
    %1192 = vmatpush1.msra.mxu0 0.0
    %1193 = vmatprep.subr.mxu0 0.0
    %1194 = vmatpush1.msra.mxu0 0.0
    %1195 = vmatprep.subr.mxu0 0.0
    %1196 = vmatpush1.msra.mxu0 0.0
    %1197 = vmatprep.subr.mxu0 0.0
    %1198 = vmatpush1.msra.mxu0 0.0
    %1199 = vmatprep.subr.mxu0 0.0
    %1200 = vmatpush1.msra.mxu0 0.0
    %1201 = vmatprep.subr.mxu0 0.0
    %1202 = vmatpush1.msra.mxu0 0.0
    %1203 = vmatprep.subr.mxu0 0.0
    %1204 = vmatpush1.msra.mxu0 0.0
    %1205 = vmatprep.subr.mxu0 0.0
    %1206 = vmatpush1.msra.mxu0 0.0
    %1207 = vmatprep.subr.mxu0 0.0
    %1208 = vmatpush1.msra.mxu0 0.0
    %1209 = vmatprep.subr.mxu0 0.0
    %1210 = vmatpush1.msra.mxu0 0.0
    %1211 = vmatprep.subr.mxu0 0.0
    %1212 = vmatpush1.msra.mxu0 0.0
    %1213 = vmatprep.subr.mxu0 0.0
    %1214 = vmatpush1.msra.mxu0 0.0
    %1215 = vmatprep.subr.mxu0 0.0
    %1216 = vmatpush1.msra.mxu0 0.0
    %1217 = vmatprep.mubr.f32.mxu0 0.0
    %1218 = vmatmul.mubr.f32.gmra.mrb[0].mxu0 %v1145
    %v1219 = vpop.f32.mrb[0].mxu0
    %v1220 = vadd.f32 0.0, %v1219
    %v1221 = vpop.f32.mrb[0].mxu0
    %1222 = vmatprep.mubr.f32.mxu0 0.0
    %1223 = vmatmul.mubr.f32.gmra.mrb[0].mxu0 %v1147
    %v1224 = vpop.f32.mrb[0].mxu0
    %v1225 = vadd.f32 0.0, %v1224
    %v1226 = vpop.f32.mrb[0].mxu0
    %1227 = vdwg.mxu0
    %v1228 = vld [vmem:[#allocation2 + $0x10] sm:$0xff]
    %v1229 = vld [vmem:[#allocation2 + $0x18] sm:$0xff]
    %vm1230 = vcmask 130048
    %v1232 = vsel %vm1230, %v1228, 0
    %v1235 = vsel %vm1230, %v1229, 0
    %1237 = vmatprep.subr.mxu0 0.0
    %1238 = vmatpush1.msra.mxu0 %v1220
    %1239 = vmatprep.subr.mxu0 0.0
    %1240 = vmatpush1.msra.mxu0 %v1225
    %1241 = vmatprep.subr.mxu0 0.0
    %1242 = vmatpush1.msra.mxu0 0.0
    %1243 = vmatprep.subr.mxu0 0.0
    %1244 = vmatpush1.msra.mxu0 0.0
    %1245 = vmatprep.subr.mxu0 0.0
    %1246 = vmatpush1.msra.mxu0 0.0
    %1247 = vmatprep.subr.mxu0 0.0
    %1248 = vmatpush1.msra.mxu0 0.0
    %1249 = vmatprep.subr.mxu0 0.0
    %1250 = vmatpush1.msra.mxu0 0.0
    %1251 = vmatprep.subr.mxu0 0.0
    %1252 = vmatpush1.msra.mxu0 0.0
    %1253 = vmatprep.subr.mxu0 0.0
    %1254 = vmatpush1.msra.mxu0 0.0
    %1255 = vmatprep.subr.mxu0 0.0
    %1256 = vmatpush1.msra.mxu0 0.0
    %1257 = vmatprep.subr.mxu0 0.0
    %1258 = vmatpush1.msra.mxu0 0.0
    %1259 = vmatprep.subr.mxu0 0.0
    %1260 = vmatpush1.msra.mxu0 0.0
    %1261 = vmatprep.subr.mxu0 0.0
    %1262 = vmatpush1.msra.mxu0 0.0
    %1263 = vmatprep.subr.mxu0 0.0
    %1264 = vmatpush1.msra.mxu0 0.0
    %1265 = vmatprep.subr.mxu0 0.0
    %1266 = vmatpush1.msra.mxu0 0.0
    %1267 = vmatprep.subr.mxu0 0.0
    %1268 = vmatpush1.msra.mxu0 0.0
    %1269 = vmatprep.subr.mxu0 0.0
    %1270 = vmatpush1.msra.mxu0 0.0
    %1271 = vmatprep.subr.mxu0 0.0
    %1272 = vmatpush1.msra.mxu0 0.0
    %1273 = vmatprep.subr.mxu0 0.0
    %1274 = vmatpush1.msra.mxu0 0.0
    %1275 = vmatprep.subr.mxu0 0.0
    %1276 = vmatpush1.msra.mxu0 0.0
    %1277 = vmatprep.subr.mxu0 0.0
    %1278 = vmatpush1.msra.mxu0 0.0
    %1279 = vmatprep.subr.mxu0 0.0
    %1280 = vmatpush1.msra.mxu0 0.0
    %1281 = vmatprep.subr.mxu0 0.0
    %1282 = vmatpush1.msra.mxu0 0.0
    %1283 = vmatprep.subr.mxu0 0.0
    %1284 = vmatpush1.msra.mxu0 0.0
    %1285 = vmatprep.subr.mxu0 0.0
    %1286 = vmatpush1.msra.mxu0 0.0
    %1287 = vmatprep.subr.mxu0 0.0
    %1288 = vmatpush1.msra.mxu0 0.0
    %1289 = vmatprep.subr.mxu0 0.0
    %1290 = vmatpush1.msra.mxu0 0.0
    %1291 = vmatprep.subr.mxu0 0.0
    %1292 = vmatpush1.msra.mxu0 0.0
    %1293 = vmatprep.subr.mxu0 0.0
    %1294 = vmatpush1.msra.mxu0 0.0
    %1295 = vmatprep.subr.mxu0 0.0
    %1296 = vmatpush1.msra.mxu0 0.0
    %1297 = vmatprep.subr.mxu0 0.0
    %1298 = vmatpush1.msra.mxu0 0.0
    %1299 = vmatprep.subr.mxu0 0.0
    %1300 = vmatpush1.msra.mxu0 0.0
    %1301 = vmatprep.mubr.f32.mxu0 0.0
    %1302 = vmatmul.mubr.f32.gmra.mrb[0].mxu0 %v1232
    %v1303 = vpop.f32.mrb[0].mxu0
    %v1304 = vadd.f32 0.0, %v1303
    %v1305 = vpop.f32.mrb[0].mxu0
    %1306 = vmatprep.mubr.f32.mxu0 0.0
    %1307 = vmatmul.mubr.f32.gmra.mrb[0].mxu0 %v1235
    %v1308 = vpop.f32.mrb[0].mxu0
    %v1309 = vadd.f32 0.0, %v1308
    %v1310 = vpop.f32.mrb[0].mxu0
    %1311 = vdwg.mxu0
    %1314 = vrot.lane.b32.xlu0 %v1304, 40
    %v1315 = vpop.permute.xlu0 %1314
    %1316 = vrot.lane.b32.xlu0 %v1309, 40
    %v1317 = vpop.permute.xlu0 %1316
    %vm1320 = vcmask 392512
    %1321 = vst.msk [vmem:[#allocation7] sm:$0xff] %vm1320, %v1315
    %1322 = vst.msk [vmem:[#allocation7 + $0x8] sm:$0xff] %vm1320, %v1317
    // Predicated region
    $region18: #{tpu_custom_call.1} parent=1 // pred_check
      _
    $region19: #{tpu_custom_call.1} parent=1 // pred_check_branch
      %1324 = sbr.rel (0) target = $region21
    $region20: #{tpu_custom_call.1} parent=1 // pred_region
      %s1326 = ssub.s32 384, 384
      %1327 = vsyncadd [#allocation4], %s1326
      %s1328 = sshll.u32 [#allocation7], 4
      %s1329 = int_to_ptr.vmem [resolvable:$true] %s1328
      %1334 = dma.vmem_to_hbm [thread:$0]  %s1329, 384, %s2, [#allocation4], 128, 128, 8
    $region21: #{tpu_custom_call.1} parent=1 // pred_fallthru
      _
    // Predicated region
    $region22: #{tpu_custom_call.1} parent=1 // pred_check
      _
    $region23: #{tpu_custom_call.1} parent=1 // pred_check_branch
      %1336 = sbr.rel (0) target = $region25
    $region24: #{tpu_custom_call.1} parent=1 // pred_region
      %1337 = dma.done [#allocation4], 384
    $region25: #{tpu_custom_call.1} parent=1 // pred_fallthru
      _
    %1338 = vsyncpa [#allocation3], 1
    %1339 = vsyncpa [#allocation6], 1
    %1340 = vsyncpa [#allocation4], 1

</llo_original>
